<compile_context>
chip_gen: v7x
topology: tpu7x:2x2x1
jax: 0.10.0
libtpu: 0.0.40
codegen_flags: <defaults>
</compile_context>

<pallas_src>
import math
import functools

import jax
import jax.numpy as jnp
from jax.experimental import pallas as pl
from jax.experimental.pallas import tpu as pltpu


# ----------------------------------------------------------------------------
# Fused EncoderLayer kernel
# ----------------------------------------------------------------------------
def _layernorm(x, gamma, beta, eps=1e-5):
    mu = jnp.mean(x, axis=-1, keepdims=True)
    var = jnp.mean(jnp.square(x - mu), axis=-1, keepdims=True)
    return (x - mu) * jax.lax.rsqrt(var + eps) * gamma + beta


def encoder_layer_kernel(xq_ref, xkv_ref,
                         wq_ref, bq_ref, wkv_ref, bkv_ref, wo_ref, bo_ref,
                         g1_ref, be1_ref, w1_ref, b1_ref, w2_ref, b2_ref,
                         g2_ref, be2_ref,
                         o_ref, *, n_heads, compute_dtype, approx_recip):
    cd = compute_dtype
    H = n_heads

    xq_f32 = xq_ref[0].astype(jnp.float32)            # (TL, D) residual path (f32)
    TL, D = xq_f32.shape
    L = xkv_ref.shape[1]
    hd = D // H

    # --- projections ----------------------------------------------------------
    # Q: the 1/sqrt(hd) scale is pre-folded into wq / bq by pack_params().
    q = jnp.dot(xq_ref[0].astype(cd), wq_ref[...],
                preferred_element_type=jnp.float32) + bq_ref[...]           # (TL, D)
    # K/V fused: one (L, D) x (D, 2D) matmul; K/V are full-L resident per tile.
    kv = jnp.dot(xkv_ref[0].astype(cd), wkv_ref[...],
                 preferred_element_type=jnp.float32) + bkv_ref[...]         # (L, 2D)

    # --- head-batched attention (no per-head loop / slicing / concat) ---------
    qh = q.reshape(TL, H, hd).transpose(1, 0, 2).astype(cd)                 # (H, TL, hd)
    kh = kv[:, :D].reshape(L, H, hd).transpose(1, 0, 2).astype(cd)          # (H, L, hd)
    vh = kv[:, D:].reshape(L, H, hd).transpose(1, 0, 2).astype(cd)          # (H, L, hd)

    s = jnp.einsum("hqd,hkd->hqk", qh, kh,
                   preferred_element_type=jnp.float32)                       # (H, TL, L)
    s = s - jnp.max(s, axis=-1, keepdims=True)
    p = jnp.exp(s)
    denom = jnp.sum(p, axis=-1, keepdims=True)
    if approx_recip:
        p = p * pl.reciprocal(denom, approx=True)     # EUP slot, ~free
    else:
        p = p / denom                                 # exact path for f32 validation

    ctx = jnp.einsum("hqk,hkd->hqd", p.astype(cd), vh,
                     preferred_element_type=jnp.float32)                     # (H, TL, hd)
    ctx = ctx.transpose(1, 0, 2).reshape(TL, D)                              # (TL, D)

    # --- output projection + residual + LayerNorm1 (dropout = identity) -------
    new_x = jnp.dot(ctx.astype(cd), wo_ref[...],
                    preferred_element_type=jnp.float32) + bo_ref[...]
    y1 = _layernorm(xq_f32 + new_x, g1_ref[...], be1_ref[...])

    # --- FFN: conv1(k=1)=Linear + ReLU + conv2(k=1)=Linear --------------------
    hid = jnp.dot(y1.astype(cd), w1_ref[...],
                  preferred_element_type=jnp.float32) + b1_ref[...]
    hid = jnp.maximum(hid, 0.0)
    y2 = jnp.dot(hid.astype(cd), w2_ref[...],
                 preferred_element_type=jnp.float32) + b2_ref[...]

    # --- residual + LayerNorm2 -------------------------------------------------
    o_ref[0] = _layernorm(y1 + y2, g2_ref[...], be2_ref[...]).astype(o_ref.dtype)


# ----------------------------------------------------------------------------
# Wrapper: weight packing (hoisted, once) + pallas_call
# ----------------------------------------------------------------------------
def pack_params(params, n_heads, compute_dtype=jnp.bfloat16):
    """Pack / pre-cast weights once (outside the per-forward path)."""
    D = params["wq"].shape[0]
    d_ff = params["w1"].shape[1]
    hd = D // n_heads
    scale = 1.0 / math.sqrt(hd)
    cd = compute_dtype
    f32 = jnp.float32
    return {
        # 1/sqrt(hd) folded into the Q projection.
        "wq": (params["wq"] * scale).astype(cd),
        "bq": (params["bq"] * scale).reshape(1, D).astype(f32),
        "wkv": jnp.concatenate([params["wk"], params["wv"]], axis=1).astype(cd),
        "bkv": jnp.concatenate([params["bk"], params["bv"]]).reshape(1, 2 * D).astype(f32),
        "wo": params["wo"].astype(cd),
        "bo": params["bo"].reshape(1, D).astype(f32),
        "g1": params["norm1_g"].reshape(1, D).astype(f32),
        "be1": params["norm1_b"].reshape(1, D).astype(f32),
        "w1": params["w1"].astype(cd),
        "b1": params["b1"].reshape(1, d_ff).astype(f32),
        "w2": params["w2"].astype(cd),
        "b2": params["b2"].reshape(1, D).astype(f32),
        "g2": params["norm2_g"].reshape(1, D).astype(f32),
        "be2": params["norm2_b"].reshape(1, D).astype(f32),
    }


def _estimate_vmem_bytes(packed, L, TL, D, d_ff, n_heads, x_itemsize):
    # Weights/biases (constant index_map, still double-buffered by the pipeline).
    w = 2 * sum(int(v.size) * v.dtype.itemsize for v in packed.values())
    # Double-buffered x (Q tile + full-L KV block) and output tile.
    io = 2 * (TL * D + L * D + TL * D) * x_itemsize
    # f32 in-kernel intermediates (q, kv, scores/probs, hidden, layernorm temps).
    f32 = 4
    inter = f32 * (4 * TL * D + 2 * L * 2 * D
                   + 2 * n_heads * TL * L + 2 * TL * d_ff)
    return w + io + inter


def encoder_layer(x, packed, n_heads, *, approx_softmax_recip=True, q_tile=512):
    """Fused EncoderLayer forward.  `packed` comes from pack_params()."""
    B, L, D = x.shape
    d_ff = packed["w1"].shape[1]
    cd = packed["wq"].dtype

    # Query-tile the sequence so (TL, L) scores and (TL, d_ff) hidden fit VMEM
    # at large L (v7x: 64 MiB/core).  K/V stay full-L resident per tile.
    TL = q_tile if (L > q_tile and L % q_tile == 0) else L
    NT = L // TL

    kernel = functools.partial(encoder_layer_kernel, n_heads=n_heads,
                               compute_dtype=cd, approx_recip=approx_softmax_recip)

    # Constant index_map -> block DMA'd once, VMEM-resident across the grid.
    def const(arr):
        return pl.BlockSpec(arr.shape, lambda b, t: (0, 0))

    order = ["wq", "bq", "wkv", "bkv", "wo", "bo", "g1", "be1",
             "w1", "b1", "w2", "b2", "g2", "be2"]
    weights = [packed[k] for k in order]

    est = _estimate_vmem_bytes(packed, L, TL, D, d_ff, n_heads, x.dtype.itemsize)
    vmem_limit = max(32 * 1024 * 1024, int(1.25 * est) + (4 << 20))

    return pl.pallas_call(
        kernel,
        out_shape=jax.ShapeDtypeStruct((B, L, D), x.dtype),
        grid_spec=pltpu.PrefetchScalarGridSpec(
            num_scalar_prefetch=0,
            grid=(B, NT),
            in_specs=[
                pl.BlockSpec((1, TL, D), lambda b, t: (b, t, 0)),   # x: Q / residual tile
                pl.BlockSpec((1, L, D), lambda b, t: (b, 0, 0)),    # x: full-L for K/V
            ] + [const(w) for w in weights],
            out_specs=pl.BlockSpec((1, TL, D), lambda b, t: (b, t, 0)),
        ),
        compiler_params=pltpu.CompilerParams(
            dimension_semantics=("parallel", "parallel"),
            vmem_limit_bytes=vmem_limit),
    )(x, x, *weights)


# ----------------------------------------------------------------------------
# Pure-JAX reference (for correctness check)
# ----------------------------------------------------------------------------
def encoder_layer_ref(x, params, n_heads):
    B, L, D = x.shape
    hd = D // n_heads
    q = (x @ params["wq"] + params["bq"]).reshape(B, L, n_heads, hd)
    k = (x @ params["wk"] + params["bk"]).reshape(B, L, n_heads, hd)
    v = (x @ params["wv"] + params["bv"]).reshape(B, L, n_heads, hd)
    scores = jnp.einsum("blhd,bshd->bhls", q, k) / math.sqrt(hd)
    attn = jax.nn.softmax(scores, axis=-1)
    ctx = jnp.einsum("bhls,bshd->blhd", attn, v).reshape(B, L, D)
    new_x = ctx @ params["wo"] + params["bo"]

    x = x + new_x

    def ln(z, g, b, eps=1e-5):
        mu = jnp.mean(z, -1, keepdims=True)
        var = jnp.mean(jnp.square(z - mu), -1, keepdims=True)
        return (z - mu) / jnp.sqrt(var + eps) * g + b

    y1 = ln(x, params["norm1_g"], params["norm1_b"])
    h = jax.nn.relu(y1 @ params["w1"] + params["b1"])
    y2 = h @ params["w2"] + params["b2"]
    return ln(y1 + y2, params["norm2_g"], params["norm2_b"])


# ----------------------------------------------------------------------------
# Deterministic parameter init
# ----------------------------------------------------------------------------
def init_params(key, d_model, d_ff, dtype=jnp.float32):
    ks = jax.random.split(key, 8)
    s_in = 1.0 / math.sqrt(d_model)
    s_ff = 1.0 / math.sqrt(d_ff)
    return {
        "wq": jax.random.normal(ks[0], (d_model, d_model), dtype) * s_in,
        "wk": jax.random.normal(ks[1], (d_model, d_model), dtype) * s_in,
        "wv": jax.random.normal(ks[2], (d_model, d_model), dtype) * s_in,
        "wo": jax.random.normal(ks[3], (d_model, d_model), dtype) * s_in,
        "bq": jnp.zeros((d_model,), dtype),
        "bk": jnp.zeros((d_model,), dtype),
        "bv": jnp.zeros((d_model,), dtype),
        "bo": jnp.zeros((d_model,), dtype),
        # conv1: Conv1d(d_model, d_ff, k=1) == Linear(d_model -> d_ff)
        "w1": jax.random.normal(ks[4], (d_model, d_ff), dtype) * s_in,
        "b1": jax.random.normal(ks[5], (d_ff,), dtype) * 0.01,
        # conv2: Conv1d(d_ff, d_model, k=1) == Linear(d_ff -> d_model)
        "w2": jax.random.normal(ks[6], (d_ff, d_model), dtype) * s_ff,
        "b2": jax.random.normal(ks[7], (d_model,), dtype) * 0.01,
        "norm1_g": jnp.ones((d_model,), dtype),
        "norm1_b": jnp.zeros((d_model,), dtype),
        "norm2_g": jnp.ones((d_model,), dtype),
        "norm2_b": jnp.zeros((d_model,), dtype),
    }


if __name__ == "__main__":
    B, L, D, H = 2, 8, 32, 4
    d_ff = 4 * D

    key = jax.random.PRNGKey(0)
    kx, kp = jax.random.split(key)
    x = jax.random.normal(kx, (B, L, D), jnp.float32)
    params = init_params(kp, D, d_ff)

    ref = encoder_layer_ref(x, params, n_heads=H)

    # f32 MXU-input path with exact softmax reciprocal: strict correctness check.
    packed_f32 = pack_params(params, n_heads=H, compute_dtype=jnp.float32)
    out_f32 = jax.block_until_ready(
        encoder_layer(x, packed_f32, n_heads=H, approx_softmax_recip=False))
    assert out_f32.shape == (B, L, D)
    err32 = float(jnp.max(jnp.abs(out_f32 - ref)))
    assert err32 < 5e-3, err32

    # bf16 MXU-input path (default / performance config): looser sanity check.
    packed_bf16 = pack_params(params, n_heads=H)          # bf16 weights, packed once
    out_bf16 = jax.block_until_ready(encoder_layer(x, packed_bf16, n_heads=H))
    err16 = float(jnp.max(jnp.abs(out_bf16.astype(jnp.float32) - ref)))
    assert err16 < 0.25, err16

    print("KERNEL_OK")
</pallas_src>

<mosaic_0001>
module attributes {stable_mosaic.version = 11 : i64} {
  func.func @encoder_layer_kernel(%arg0: i32, %arg1: i32, %arg2: memref<1x8x32xf32, #tpu.memory_space<vmem>>, %arg3: memref<1x8x32xf32, #tpu.memory_space<vmem>>, %arg4: memref<32x32xf32, #tpu.memory_space<vmem>>, %arg5: memref<1x32xf32, #tpu.memory_space<vmem>>, %arg6: memref<32x64xf32, #tpu.memory_space<vmem>>, %arg7: memref<1x64xf32, #tpu.memory_space<vmem>>, %arg8: memref<32x32xf32, #tpu.memory_space<vmem>>, %arg9: memref<1x32xf32, #tpu.memory_space<vmem>>, %arg10: memref<1x32xf32, #tpu.memory_space<vmem>>, %arg11: memref<1x32xf32, #tpu.memory_space<vmem>>, %arg12: memref<32x128xf32, #tpu.memory_space<vmem>>, %arg13: memref<1x128xf32, #tpu.memory_space<vmem>>, %arg14: memref<128x32xf32, #tpu.memory_space<vmem>>, %arg15: memref<1x32xf32, #tpu.memory_space<vmem>>, %arg16: memref<1x32xf32, #tpu.memory_space<vmem>>, %arg17: memref<1x32xf32, #tpu.memory_space<vmem>>, %arg18: memref<1x8x32xf32, #tpu.memory_space<vmem>>) attributes {dimension_semantics = [#tpu.dimension_semantics<parallel>, #tpu.dimension_semantics<parallel>], iteration_bounds = array<i64: 2, 1>, scalar_prefetch = 0 : i64, scratch_operands = 0 : i64, tpu.core_type = #tpu.core_type<tc>, window_params = [{transform_indices = @transform_0, window_bounds = array<i64: 1, 8, 32>}, {transform_indices = @transform_1, window_bounds = array<i64: 1, 8, 32>}, {pipeline_mode = #tpu.pipeline_mode<synchronous>, transform_indices = @transform_2, window_bounds = array<i64: 32, 32>}, {pipeline_mode = #tpu.pipeline_mode<synchronous>, transform_indices = @transform_3, window_bounds = array<i64: 1, 32>}, {pipeline_mode = #tpu.pipeline_mode<synchronous>, transform_indices = @transform_4, window_bounds = array<i64: 32, 64>}, {pipeline_mode = #tpu.pipeline_mode<synchronous>, transform_indices = @transform_5, window_bounds = array<i64: 1, 64>}, {pipeline_mode = #tpu.pipeline_mode<synchronous>, transform_indices = @transform_6, window_bounds = array<i64: 32, 32>}, {pipeline_mode = #tpu.pipeline_mode<synchronous>, transform_indices = @transform_7, window_bounds = array<i64: 1, 32>}, {pipeline_mode = #tpu.pipeline_mode<synchronous>, transform_indices = @transform_8, window_bounds = array<i64: 1, 32>}, {pipeline_mode = #tpu.pipeline_mode<synchronous>, transform_indices = @transform_9, window_bounds = array<i64: 1, 32>}, {pipeline_mode = #tpu.pipeline_mode<synchronous>, transform_indices = @transform_10, window_bounds = array<i64: 32, 128>}, {pipeline_mode = #tpu.pipeline_mode<synchronous>, transform_indices = @transform_11, window_bounds = array<i64: 1, 128>}, {pipeline_mode = #tpu.pipeline_mode<synchronous>, transform_indices = @transform_12, window_bounds = array<i64: 128, 32>}, {pipeline_mode = #tpu.pipeline_mode<synchronous>, transform_indices = @transform_13, window_bounds = array<i64: 1, 32>}, {pipeline_mode = #tpu.pipeline_mode<synchronous>, transform_indices = @transform_14, window_bounds = array<i64: 1, 32>}, {pipeline_mode = #tpu.pipeline_mode<synchronous>, transform_indices = @transform_15, window_bounds = array<i64: 1, 32>}, {transform_indices = @transform_16, window_bounds = array<i64: 1, 8, 32>}]} {
    %c0 = arith.constant 0 : index
    %c0_0 = arith.constant 0 : index
    %c0_1 = arith.constant 0 : index
    %0 = vector.load %arg2[%c0, %c0_0, %c0_1] : memref<1x8x32xf32, #tpu.memory_space<vmem>>, vector<1x8x32xf32>
    %1 = vector.shape_cast %0 : vector<1x8x32xf32> to vector<8x32xf32>
    %c0_2 = arith.constant 0 : index
    %c0_3 = arith.constant 0 : index
    %c0_4 = arith.constant 0 : index
    %2 = vector.load %arg2[%c0_2, %c0_3, %c0_4] : memref<1x8x32xf32, #tpu.memory_space<vmem>>, vector<1x8x32xf32>
    %3 = vector.shape_cast %2 : vector<1x8x32xf32> to vector<8x32xf32>
    %c0_5 = arith.constant 0 : index
    %c0_6 = arith.constant 0 : index
    %4 = vector.load %arg4[%c0_5, %c0_6] : memref<32x32xf32, #tpu.memory_space<vmem>>, vector<32x32xf32>
    %cst = arith.constant dense<0.000000e+00> : vector<8x32xf32>
    %5 = tpu.matmul %3, %4, %cst {dimension_numbers = #tpu.dot_dimension_numbers<[1], [0], [0], [1], [0, 0, 1, 1], [], []>} : vector<8x32xf32>, vector<32x32xf32>, vector<8x32xf32> -> vector<8x32xf32>
    %c0_7 = arith.constant 0 : index
    %c0_8 = arith.constant 0 : index
    %6 = vector.load %arg5[%c0_7, %c0_8] : memref<1x32xf32, #tpu.memory_space<vmem>>, vector<1x32xf32>
    %7 = vector.broadcast %6 : vector<1x32xf32> to vector<8x32xf32>
    %8 = arith.addf %5, %7 : vector<8x32xf32>
    %c0_9 = arith.constant 0 : index
    %c0_10 = arith.constant 0 : index
    %c0_11 = arith.constant 0 : index
    %9 = vector.load %arg3[%c0_9, %c0_10, %c0_11] : memref<1x8x32xf32, #tpu.memory_space<vmem>>, vector<1x8x32xf32>
    %10 = vector.shape_cast %9 : vector<1x8x32xf32> to vector<8x32xf32>
    %c0_12 = arith.constant 0 : index
    %c0_13 = arith.constant 0 : index
    %11 = vector.load %arg6[%c0_12, %c0_13] : memref<32x64xf32, #tpu.memory_space<vmem>>, vector<32x64xf32>
    %cst_14 = arith.constant dense<0.000000e+00> : vector<8x64xf32>
    %12 = tpu.matmul %10, %11, %cst_14 {dimension_numbers = #tpu.dot_dimension_numbers<[1], [0], [0], [1], [0, 0, 1, 1], [], []>} : vector<8x32xf32>, vector<32x64xf32>, vector<8x64xf32> -> vector<8x64xf32>
    %c0_15 = arith.constant 0 : index
    %c0_16 = arith.constant 0 : index
    %13 = vector.load %arg7[%c0_15, %c0_16] : memref<1x64xf32, #tpu.memory_space<vmem>>, vector<1x64xf32>
    %14 = vector.broadcast %13 : vector<1x64xf32> to vector<8x64xf32>
    %15 = arith.addf %12, %14 : vector<8x64xf32>
    %16 = vector.shape_cast %8 : vector<8x32xf32> to vector<8x4x8xf32>
    %17 = tpu.transpose %16, [1, 0, 2] : vector<8x4x8xf32> -> vector<4x8x8xf32>
    %18 = vector.extract_strided_slice %15 {offsets = [0, 0], sizes = [8, 32], strides = [1, 1]} : vector<8x64xf32> to vector<8x32xf32>
    %19 = vector.shape_cast %18 : vector<8x32xf32> to vector<8x4x8xf32>
    %20 = tpu.transpose %19, [1, 0, 2] : vector<8x4x8xf32> -> vector<4x8x8xf32>
    %21 = vector.extract_strided_slice %15 {offsets = [0, 32], sizes = [8, 32], strides = [1, 1]} : vector<8x64xf32> to vector<8x32xf32>
    %22 = vector.shape_cast %21 : vector<8x32xf32> to vector<8x4x8xf32>
    %23 = tpu.transpose %22, [1, 0, 2] : vector<8x4x8xf32> -> vector<4x8x8xf32>
    "tpu.trace_start"() <{level = 10 : i32, message = "hqd,hkd->hqk"}> : () -> ()
    %cst_17 = arith.constant dense<0.000000e+00> : vector<4x8x8xf32>
    %24 = tpu.matmul %17, %20, %cst_17 {dimension_numbers = #tpu.dot_dimension_numbers<[2], [2], [1], [1], [0, 0, 0, 1, 1, 1], [0], [0]>} : vector<4x8x8xf32>, vector<4x8x8xf32>, vector<4x8x8xf32> -> vector<4x8x8xf32>
    "tpu.trace_stop"() : () -> ()
    %cst_18 = arith.constant dense<0xFF800000> : vector<4x8xf32>
    %25 = vector.multi_reduction <maximumf>, %24, %cst_18 [2] : vector<4x8x8xf32> to vector<4x8xf32>
    %26 = vector.shape_cast %25 : vector<4x8xf32> to vector<4x8x1xf32>
    %27 = vector.broadcast %26 : vector<4x8x1xf32> to vector<4x8x8xf32>
    %28 = arith.subf %24, %27 : vector<4x8x8xf32>
    %29 = math.exp %28 : vector<4x8x8xf32>
    %cst_19 = arith.constant dense<0.000000e+00> : vector<4x8xf32>
    %30 = vector.multi_reduction <add>, %29, %cst_19 [2] : vector<4x8x8xf32> to vector<4x8xf32>
    %31 = vector.shape_cast %30 : vector<4x8xf32> to vector<4x8x1xf32>
    %32 = vector.broadcast %31 : vector<4x8x1xf32> to vector<4x8x8xf32>
    %33 = arith.divf %29, %32 : vector<4x8x8xf32>
    "tpu.trace_start"() <{level = 10 : i32, message = "hqk,hkd->hqd"}> : () -> ()
    %cst_20 = arith.constant dense<0.000000e+00> : vector<4x8x8xf32>
    %34 = tpu.matmul %33, %23, %cst_20 {dimension_numbers = #tpu.dot_dimension_numbers<[2], [1], [1], [2], [0, 0, 0, 1, 1, 2], [0], [0]>} : vector<4x8x8xf32>, vector<4x8x8xf32>, vector<4x8x8xf32> -> vector<4x8x8xf32>
    "tpu.trace_stop"() : () -> ()
    %35 = tpu.transpose %34, [1, 0, 2] : vector<4x8x8xf32> -> vector<8x4x8xf32>
    %36 = vector.shape_cast %35 : vector<8x4x8xf32> to vector<8x32xf32>
    %c0_21 = arith.constant 0 : index
    %c0_22 = arith.constant 0 : index
    %37 = vector.load %arg8[%c0_21, %c0_22] : memref<32x32xf32, #tpu.memory_space<vmem>>, vector<32x32xf32>
    %cst_23 = arith.constant dense<0.000000e+00> : vector<8x32xf32>
    %38 = tpu.matmul %36, %37, %cst_23 {dimension_numbers = #tpu.dot_dimension_numbers<[1], [0], [0], [1], [0, 0, 1, 1], [], []>} : vector<8x32xf32>, vector<32x32xf32>, vector<8x32xf32> -> vector<8x32xf32>
    %c0_24 = arith.constant 0 : index
    %c0_25 = arith.constant 0 : index
    %39 = vector.load %arg9[%c0_24, %c0_25] : memref<1x32xf32, #tpu.memory_space<vmem>>, vector<1x32xf32>
    %40 = vector.broadcast %39 : vector<1x32xf32> to vector<8x32xf32>
    %41 = arith.addf %38, %40 : vector<8x32xf32>
    %42 = arith.addf %1, %41 : vector<8x32xf32>
    %c0_26 = arith.constant 0 : index
    %c0_27 = arith.constant 0 : index
    %43 = vector.load %arg10[%c0_26, %c0_27] : memref<1x32xf32, #tpu.memory_space<vmem>>, vector<1x32xf32>
    %c0_28 = arith.constant 0 : index
    %c0_29 = arith.constant 0 : index
    %44 = vector.load %arg11[%c0_28, %c0_29] : memref<1x32xf32, #tpu.memory_space<vmem>>, vector<1x32xf32>
    %cst_30 = arith.constant dense<0.000000e+00> : vector<8xf32>
    %45 = vector.multi_reduction <add>, %42, %cst_30 [1] : vector<8x32xf32> to vector<8xf32>
    %46 = vector.shape_cast %45 : vector<8xf32> to vector<8x1xf32>
    %cst_31 = arith.constant 3.200000e+01 : f32
    %47 = vector.broadcast %cst_31 : f32 to vector<8x1xf32>
    %48 = arith.divf %46, %47 : vector<8x1xf32>
    %49 = vector.broadcast %48 : vector<8x1xf32> to vector<8x32xf32>
    %50 = arith.subf %42, %49 : vector<8x32xf32>
    %51 = arith.mulf %50, %50 : vector<8x32xf32>
    %cst_32 = arith.constant dense<0.000000e+00> : vector<8xf32>
    %52 = vector.multi_reduction <add>, %51, %cst_32 [1] : vector<8x32xf32> to vector<8xf32>
    %53 = vector.shape_cast %52 : vector<8xf32> to vector<8x1xf32>
    %cst_33 = arith.constant 3.200000e+01 : f32
    %54 = vector.broadcast %cst_33 : f32 to vector<8x1xf32>
    %55 = arith.divf %53, %54 : vector<8x1xf32>
    %56 = vector.broadcast %48 : vector<8x1xf32> to vector<8x32xf32>
    %57 = arith.subf %42, %56 : vector<8x32xf32>
    %cst_34 = arith.constant 9.99999974E-6 : f32
    %58 = vector.broadcast %cst_34 : f32 to vector<8x1xf32>
    %59 = arith.addf %55, %58 : vector<8x1xf32>
    %60 = math.rsqrt %59 : vector<8x1xf32>
    %61 = vector.broadcast %60 : vector<8x1xf32> to vector<8x32xf32>
    %62 = arith.mulf %57, %61 : vector<8x32xf32>
    %63 = vector.broadcast %43 : vector<1x32xf32> to vector<8x32xf32>
    %64 = arith.mulf %62, %63 : vector<8x32xf32>
    %65 = vector.broadcast %44 : vector<1x32xf32> to vector<8x32xf32>
    %66 = arith.addf %64, %65 : vector<8x32xf32>
    %c0_35 = arith.constant 0 : index
    %c0_36 = arith.constant 0 : index
    %67 = vector.load %arg12[%c0_35, %c0_36] : memref<32x128xf32, #tpu.memory_space<vmem>>, vector<32x128xf32>
    %cst_37 = arith.constant dense<0.000000e+00> : vector<8x128xf32>
    %68 = tpu.matmul %66, %67, %cst_37 {dimension_numbers = #tpu.dot_dimension_numbers<[1], [0], [0], [1], [0, 0, 1, 1], [], []>} : vector<8x32xf32>, vector<32x128xf32>, vector<8x128xf32> -> vector<8x128xf32>
    %c0_38 = arith.constant 0 : index
    %c0_39 = arith.constant 0 : index
    %69 = vector.load %arg13[%c0_38, %c0_39] : memref<1x128xf32, #tpu.memory_space<vmem>>, vector<1x128xf32>
    %70 = vector.broadcast %69 : vector<1x128xf32> to vector<8x128xf32>
    %71 = arith.addf %68, %70 : vector<8x128xf32>
    %cst_40 = arith.constant 0.000000e+00 : f32
    %72 = vector.broadcast %cst_40 : f32 to vector<8x128xf32>
    %73 = arith.maximumf %71, %72 : vector<8x128xf32>
    %c0_41 = arith.constant 0 : index
    %c0_42 = arith.constant 0 : index
    %74 = vector.load %arg14[%c0_41, %c0_42] : memref<128x32xf32, #tpu.memory_space<vmem>>, vector<128x32xf32>
    %cst_43 = arith.constant dense<0.000000e+00> : vector<8x32xf32>
    %75 = tpu.matmul %73, %74, %cst_43 {dimension_numbers = #tpu.dot_dimension_numbers<[1], [0], [0], [1], [0, 0, 1, 1], [], []>} : vector<8x128xf32>, vector<128x32xf32>, vector<8x32xf32> -> vector<8x32xf32>
    %c0_44 = arith.constant 0 : index
    %c0_45 = arith.constant 0 : index
    %76 = vector.load %arg15[%c0_44, %c0_45] : memref<1x32xf32, #tpu.memory_space<vmem>>, vector<1x32xf32>
    %77 = vector.broadcast %76 : vector<1x32xf32> to vector<8x32xf32>
    %78 = arith.addf %75, %77 : vector<8x32xf32>
    %79 = arith.addf %66, %78 : vector<8x32xf32>
    %c0_46 = arith.constant 0 : index
    %c0_47 = arith.constant 0 : index
    %80 = vector.load %arg16[%c0_46, %c0_47] : memref<1x32xf32, #tpu.memory_space<vmem>>, vector<1x32xf32>
    %c0_48 = arith.constant 0 : index
    %c0_49 = arith.constant 0 : index
    %81 = vector.load %arg17[%c0_48, %c0_49] : memref<1x32xf32, #tpu.memory_space<vmem>>, vector<1x32xf32>
    %cst_50 = arith.constant dense<0.000000e+00> : vector<8xf32>
    %82 = vector.multi_reduction <add>, %79, %cst_50 [1] : vector<8x32xf32> to vector<8xf32>
    %83 = vector.shape_cast %82 : vector<8xf32> to vector<8x1xf32>
    %cst_51 = arith.constant 3.200000e+01 : f32
    %84 = vector.broadcast %cst_51 : f32 to vector<8x1xf32>
    %85 = arith.divf %83, %84 : vector<8x1xf32>
    %86 = vector.broadcast %85 : vector<8x1xf32> to vector<8x32xf32>
    %87 = arith.subf %79, %86 : vector<8x32xf32>
    %88 = arith.mulf %87, %87 : vector<8x32xf32>
    %cst_52 = arith.constant dense<0.000000e+00> : vector<8xf32>
    %89 = vector.multi_reduction <add>, %88, %cst_52 [1] : vector<8x32xf32> to vector<8xf32>
    %90 = vector.shape_cast %89 : vector<8xf32> to vector<8x1xf32>
    %cst_53 = arith.constant 3.200000e+01 : f32
    %91 = vector.broadcast %cst_53 : f32 to vector<8x1xf32>
    %92 = arith.divf %90, %91 : vector<8x1xf32>
    %93 = vector.broadcast %85 : vector<8x1xf32> to vector<8x32xf32>
    %94 = arith.subf %79, %93 : vector<8x32xf32>
    %cst_54 = arith.constant 9.99999974E-6 : f32
    %95 = vector.broadcast %cst_54 : f32 to vector<8x1xf32>
    %96 = arith.addf %92, %95 : vector<8x1xf32>
    %97 = math.rsqrt %96 : vector<8x1xf32>
    %98 = vector.broadcast %97 : vector<8x1xf32> to vector<8x32xf32>
    %99 = arith.mulf %94, %98 : vector<8x32xf32>
    %100 = vector.broadcast %80 : vector<1x32xf32> to vector<8x32xf32>
    %101 = arith.mulf %99, %100 : vector<8x32xf32>
    %102 = vector.broadcast %81 : vector<1x32xf32> to vector<8x32xf32>
    %103 = arith.addf %101, %102 : vector<8x32xf32>
    %c0_55 = arith.constant 0 : index
    %c0_56 = arith.constant 0 : index
    %c0_57 = arith.constant 0 : index
    %104 = vector.load %arg18[%c0_55, %c0_56, %c0_57] : memref<1x8x32xf32, #tpu.memory_space<vmem>>, vector<1x8x32xf32>
    %105 = vector.shape_cast %104 : vector<1x8x32xf32> to vector<8x32xf32>
    %106 = vector.shape_cast %103 : vector<8x32xf32> to vector<1x8x32xf32>
    tpu.vector_store %arg18[%c0_55, %c0_56, %c0_57], %106 {strides = array<i32>} : memref<1x8x32xf32, #tpu.memory_space<vmem>>, vector<1x8x32xf32>,
    return
  }
  func.func @transform_0(%arg0: i32, %arg1: i32) -> (i32, i32, i32) {
    %c0_i32 = arith.constant 0 : i32
    %c0_i32_0 = arith.constant 0 : i32
    return %arg0, %arg1, %c0_i32 : i32, i32, i32
  }
  func.func @transform_1(%arg0: i32, %arg1: i32) -> (i32, i32, i32) {
    %c0_i32 = arith.constant 0 : i32
    %c0_i32_0 = arith.constant 0 : i32
    %c0_i32_1 = arith.constant 0 : i32
    return %arg0, %c0_i32, %c0_i32_0 : i32, i32, i32
  }
  func.func @transform_2(%arg0: i32, %arg1: i32) -> (i32, i32) {
    %c0_i32 = arith.constant 0 : i32
    %c0_i32_0 = arith.constant 0 : i32
    %c0_i32_1 = arith.constant 0 : i32
    return %c0_i32, %c0_i32_0 : i32, i32
  }
  func.func @transform_3(%arg0: i32, %arg1: i32) -> (i32, i32) {
    %c0_i32 = arith.constant 0 : i32
    %c0_i32_0 = arith.constant 0 : i32
    %c0_i32_1 = arith.constant 0 : i32
    return %c0_i32, %c0_i32_0 : i32, i32
  }
  func.func @transform_4(%arg0: i32, %arg1: i32) -> (i32, i32) {
    %c0_i32 = arith.constant 0 : i32
    %c0_i32_0 = arith.constant 0 : i32
    %c0_i32_1 = arith.constant 0 : i32
    return %c0_i32, %c0_i32_0 : i32, i32
  }
  func.func @transform_5(%arg0: i32, %arg1: i32) -> (i32, i32) {
    %c0_i32 = arith.constant 0 : i32
    %c0_i32_0 = arith.constant 0 : i32
    %c0_i32_1 = arith.constant 0 : i32
    return %c0_i32, %c0_i32_0 : i32, i32
  }
  func.func @transform_6(%arg0: i32, %arg1: i32) -> (i32, i32) {
    %c0_i32 = arith.constant 0 : i32
    %c0_i32_0 = arith.constant 0 : i32
    %c0_i32_1 = arith.constant 0 : i32
    return %c0_i32, %c0_i32_0 : i32, i32
  }
  func.func @transform_7(%arg0: i32, %arg1: i32) -> (i32, i32) {
    %c0_i32 = arith.constant 0 : i32
    %c0_i32_0 = arith.constant 0 : i32
    %c0_i32_1 = arith.constant 0 : i32
    return %c0_i32, %c0_i32_0 : i32, i32
  }
  func.func @transform_8(%arg0: i32, %arg1: i32) -> (i32, i32) {
    %c0_i32 = arith.constant 0 : i32
    %c0_i32_0 = arith.constant 0 : i32
    %c0_i32_1 = arith.constant 0 : i32
    return %c0_i32, %c0_i32_0 : i32, i32
  }
  func.func @transform_9(%arg0: i32, %arg1: i32) -> (i32, i32) {
    %c0_i32 = arith.constant 0 : i32
    %c0_i32_0 = arith.constant 0 : i32
    %c0_i32_1 = arith.constant 0 : i32
    return %c0_i32, %c0_i32_0 : i32, i32
  }
  func.func @transform_10(%arg0: i32, %arg1: i32) -> (i32, i32) {
    %c0_i32 = arith.constant 0 : i32
    %c0_i32_0 = arith.constant 0 : i32
    %c0_i32_1 = arith.constant 0 : i32
    return %c0_i32, %c0_i32_0 : i32, i32
  }
  func.func @transform_11(%arg0: i32, %arg1: i32) -> (i32, i32) {
    %c0_i32 = arith.constant 0 : i32
    %c0_i32_0 = arith.constant 0 : i32
    %c0_i32_1 = arith.constant 0 : i32
    return %c0_i32, %c0_i32_0 : i32, i32
  }
  func.func @transform_12(%arg0: i32, %arg1: i32) -> (i32, i32) {
    %c0_i32 = arith.constant 0 : i32
    %c0_i32_0 = arith.constant 0 : i32
    %c0_i32_1 = arith.constant 0 : i32
    return %c0_i32, %c0_i32_0 : i32, i32
  }
  func.func @transform_13(%arg0: i32, %arg1: i32) -> (i32, i32) {
    %c0_i32 = arith.constant 0 : i32
    %c0_i32_0 = arith.constant 0 : i32
    %c0_i32_1 = arith.constant 0 : i32
    return %c0_i32, %c0_i32_0 : i32, i32
  }
  func.func @transform_14(%arg0: i32, %arg1: i32) -> (i32, i32) {
    %c0_i32 = arith.constant 0 : i32
    %c0_i32_0 = arith.constant 0 : i32
    %c0_i32_1 = arith.constant 0 : i32
    return %c0_i32, %c0_i32_0 : i32, i32
  }
  func.func @transform_15(%arg0: i32, %arg1: i32) -> (i32, i32) {
    %c0_i32 = arith.constant 0 : i32
    %c0_i32_0 = arith.constant 0 : i32
    %c0_i32_1 = arith.constant 0 : i32
    return %c0_i32, %c0_i32_0 : i32, i32
  }
  func.func @transform_16(%arg0: i32, %arg1: i32) -> (i32, i32, i32) {
    %c0_i32 = arith.constant 0 : i32
    %c0_i32_0 = arith.constant 0 : i32
    return %arg0, %arg1, %c0_i32 : i32, i32, i32
  }
}

</mosaic_0001>

<llo_original>
// kernel: tpu_custom_call.1
$region0: #{tpu_custom_call.1}
  #allocation0 [shape = 'u32[]', space=smem, size = 0x4, offset = 0x4, fixed_abs, tag = 'smem constant byte address 0x4 - core index']
  #allocation1 [shape = 'u32[144,128]{1,0:T(1,128)}', space=vmem, size = 0x12000, scoped, tag = 'internal scratch']
  %s0 = inlined_call_operand.vmem [shape: f32[2,8,32], index: 0, kind: input, shape index: {}]
  %s1 = inlined_call_operand.vmem [shape: f32[2,8,32], index: 1, kind: input, shape index: {}]
  %s2 = inlined_call_operand.vmem [shape: f32[32,32], index: 2, kind: input, shape index: {}]
  %s3 = inlined_call_operand.vmem [shape: f32[1,32], index: 3, kind: input, shape index: {}]
  %s4 = inlined_call_operand.vmem [shape: f32[32,64], index: 4, kind: input, shape index: {}]
  %s5 = inlined_call_operand.vmem [shape: f32[1,64], index: 5, kind: input, shape index: {}]
  %s6 = inlined_call_operand.vmem [shape: f32[32,32], index: 6, kind: input, shape index: {}]
  %s7 = inlined_call_operand.vmem [shape: f32[1,32], index: 7, kind: input, shape index: {}]
  %s8 = inlined_call_operand.vmem [shape: f32[1,32], index: 8, kind: input, shape index: {}]
  %s9 = inlined_call_operand.vmem [shape: f32[1,32], index: 9, kind: input, shape index: {}]
  %s10 = inlined_call_operand.vmem [shape: f32[32,128], index: 10, kind: input, shape index: {}]
  %s11 = inlined_call_operand.vmem [shape: f32[1,128], index: 11, kind: input, shape index: {}]
  %s12 = inlined_call_operand.vmem [shape: f32[128,32], index: 12, kind: input, shape index: {}]
  %s13 = inlined_call_operand.vmem [shape: f32[1,32], index: 13, kind: input, shape index: {}]
  %s14 = inlined_call_operand.vmem [shape: f32[1,32], index: 14, kind: input, shape index: {}]
  %s15 = inlined_call_operand.vmem [shape: f32[1,32], index: 15, kind: input, shape index: {}]
  %s16 = inlined_call_operand.hbm [shape: f32[2,8,32], index: 16, kind: output, shape index: {}]
  %s17 = sld [smem:[#allocation0]]
  $region97: #{tpu_custom_call.1} parent=0
    _
  %s19 = ssub.s32 1, %s17
  %s20 = scalar_select 0, %s19, %s17
  $region1: #{tpu_custom_call.1} parent=0
    #allocation2 [shape = 'u8[8192]{0}', space=vmem, size = 0x2000, scoped, tag = 'output window, operand 0']
    #allocation3 [shape = 's32[2]{0}', space=sflag, size = 0x8, scoped, tag = 'scoped memory for tpu_custom_call.1']
    %21 = vsyncpa [#allocation3], 0
    %s22 = scalar_lea.sflag [#allocation3], 1
    %23 = vsyncpa %s22, 0
    loop: start=0, step=1, limit=4
    $region2: #{tpu_custom_call.1} parent=1 // loop_pre_header
      _
    $region3: #{tpu_custom_call.1} parent=1 // loop_header
      %s25 = sphi 0, %s29
      %p26 = scmp.ge.s32.totalorder %s25, 4
      %s32 = sphi 0, %s44
      %s33 = sphi 0, %s40
      %s34 = sphi 0, %s32
      %s35 = sphi 0, %s33
      %s36 = sphi 0, %s34
      %s37 = sphi 0, %s35
      %s49 = sphi 0, %s51
      %s52 = sphi 0, %s49
      %s53 = sphi 0, %s52
      %s69 = sphi 0, %s53
      %s75 = sphi 0, %s77
      %s78 = sphi 0, %s75
      %s79 = sphi 0, %s78
      %s95 = sphi 0, %s79
      %s99 = sphi 0, %s99
      %s101 = sphi 0, %s99
      %s102 = sphi 0, %s101
      %s116 = sphi 0, %s102
      %s120 = sphi 0, %s120
      %s122 = sphi 0, %s120
      %s123 = sphi 0, %s122
      %s137 = sphi 0, %s123
      %s141 = sphi 0, %s141
      %s143 = sphi 0, %s141
      %s144 = sphi 0, %s143
      %s158 = sphi 0, %s144
      %s162 = sphi 0, %s162
      %s164 = sphi 0, %s162
      %s165 = sphi 0, %s164
      %s179 = sphi 0, %s165
      %s183 = sphi 0, %s183
      %s185 = sphi 0, %s183
      %s186 = sphi 0, %s185
      %s200 = sphi 0, %s186
      %s204 = sphi 0, %s204
      %s206 = sphi 0, %s204
      %s207 = sphi 0, %s206
      %s221 = sphi 0, %s207
      %s225 = sphi 0, %s225
      %s227 = sphi 0, %s225
      %s228 = sphi 0, %s227
      %s242 = sphi 0, %s228
      %s246 = sphi 0, %s246
      %s248 = sphi 0, %s246
      %s249 = sphi 0, %s248
      %s263 = sphi 0, %s249
      %s267 = sphi 0, %s267
      %s269 = sphi 0, %s267
      %s270 = sphi 0, %s269
      %s284 = sphi 0, %s270
      %s288 = sphi 0, %s288
      %s290 = sphi 0, %s288
      %s291 = sphi 0, %s290
      %s305 = sphi 0, %s291
      %s309 = sphi 0, %s309
      %s311 = sphi 0, %s309
      %s312 = sphi 0, %s311
      %s326 = sphi 0, %s312
      %s330 = sphi 0, %s330
      %s332 = sphi 0, %s330
      %s333 = sphi 0, %s332
      %s347 = sphi 0, %s333
      %s351 = sphi 0, %s351
      %s353 = sphi 0, %s351
      %s354 = sphi 0, %s353
      %s368 = sphi 0, %s354
      %s372 = sphi 0, %s372
      %s374 = sphi 0, %s372
      %s375 = sphi 0, %s374
      %s389 = sphi 0, %s375
      %s397 = sphi 0, %s399
      %s400 = sphi 0, %s397
      %s401 = sphi 0, %s400
      %s417 = sphi 0, %s401
    $region4: #{tpu_custom_call.1} parent=1 // loop_header_branch
      %28 = sbr.rel (%p26) target = $region8
    $region5: #{tpu_custom_call.1} parent=1 // loop_body
      %s30 = ssub.s32 %s25, 1
      %s31 = ssub.s32 %s25, 2
      %s38 = sadd.s32 1, %s33
      %p39 = scmp.ge.s32.totalorder %s38, 1
      %s40 = scalar_select %p39, 0, %s38
      %s41 = sadd.s32 1, %s32
      %s42 = scalar_select %p39, %s41, %s32
      %p43 = scmp.ge.s32.totalorder %s42, 2
      %s44 = scalar_select %p43, 0, %s42
      %s45 = ssub.s32 %s32, %s44
      %s46 = ssub.s32 %s33, %s40
      %s47 = sor.u32 %s45, %s46
      %p48 = scmp.eq.s32.totalorder %s47, 0
      %s50 = sadd.s32 %s49, 1
      %s51 = scalar_select %p48, %s49, %s50
      %p54 = pneg %p48
      %p55 = scmp.eq.s32.totalorder %s25, 1
      %p56 = por %p54, %p55
      %p57 = scmp.ne.s32.totalorder %s49, %s52
      %p58 = scmp.eq.s32.totalorder %s25, 0
      %p59 = por %p57, %p58
      %p60 = scmp.ne.s32.totalorder %s49, %s52
      %p61 = scmp.eq.s32.totalorder %s30, 1
      %p62 = por %p60, %p61
      %p63 = scmp.ne.s32.totalorder %s52, %s53
      %p64 = scmp.eq.s32.totalorder %s30, 0
      %p65 = por %p63, %p64
      %p66 = scmp.ne.s32.totalorder %s52, %s53
      %p67 = scmp.eq.s32.totalorder %s31, 1
      %p68 = por %p66, %p67
      %p70 = scmp.ne.s32.totalorder %s53, %s69
      %p71 = scmp.eq.s32.totalorder %s31, 0
      %p72 = por %p70, %p71
      %s73 = ssub.s32 %s32, %s44
      %p74 = scmp.eq.s32.totalorder %s73, 0
      %s76 = sadd.s32 %s75, 1
      %s77 = scalar_select %p74, %s75, %s76
      %p80 = pneg %p74
      %p81 = scmp.eq.s32.totalorder %s25, 1
      %p82 = por %p80, %p81
      %p83 = scmp.ne.s32.totalorder %s75, %s78
      %p84 = scmp.eq.s32.totalorder %s25, 0
      %p85 = por %p83, %p84
      %p86 = scmp.ne.s32.totalorder %s75, %s78
      %p87 = scmp.eq.s32.totalorder %s30, 1
      %p88 = por %p86, %p87
      %p89 = scmp.ne.s32.totalorder %s78, %s79
      %p90 = scmp.eq.s32.totalorder %s30, 0
      %p91 = por %p89, %p90
      %p92 = scmp.ne.s32.totalorder %s78, %s79
      %p93 = scmp.eq.s32.totalorder %s31, 1
      %p94 = por %p92, %p93
      %p96 = scmp.ne.s32.totalorder %s79, %s95
      %p97 = scmp.eq.s32.totalorder %s31, 0
      %p98 = por %p96, %p97
      %s100 = sadd.s32 %s99, 1
      %p103 = scmp.eq.s32.totalorder %s25, 1
      %p104 = scmp.ne.s32.totalorder %s99, %s101
      %p105 = scmp.eq.s32.totalorder %s25, 0
      %p106 = por %p104, %p105
      %p107 = scmp.ne.s32.totalorder %s99, %s101
      %p108 = scmp.eq.s32.totalorder %s30, 1
      %p109 = por %p107, %p108
      %p110 = scmp.ne.s32.totalorder %s101, %s102
      %p111 = scmp.eq.s32.totalorder %s30, 0
      %p112 = por %p110, %p111
      %p113 = scmp.ne.s32.totalorder %s101, %s102
      %p114 = scmp.eq.s32.totalorder %s31, 1
      %p115 = por %p113, %p114
      %p117 = scmp.ne.s32.totalorder %s102, %s116
      %p118 = scmp.eq.s32.totalorder %s31, 0
      %p119 = por %p117, %p118
      %s121 = sadd.s32 %s120, 1
      %p124 = scmp.eq.s32.totalorder %s25, 1
      %p125 = scmp.ne.s32.totalorder %s120, %s122
      %p126 = scmp.eq.s32.totalorder %s25, 0
      %p127 = por %p125, %p126
      %p128 = scmp.ne.s32.totalorder %s120, %s122
      %p129 = scmp.eq.s32.totalorder %s30, 1
      %p130 = por %p128, %p129
      %p131 = scmp.ne.s32.totalorder %s122, %s123
      %p132 = scmp.eq.s32.totalorder %s30, 0
      %p133 = por %p131, %p132
      %p134 = scmp.ne.s32.totalorder %s122, %s123
      %p135 = scmp.eq.s32.totalorder %s31, 1
      %p136 = por %p134, %p135
      %p138 = scmp.ne.s32.totalorder %s123, %s137
      %p139 = scmp.eq.s32.totalorder %s31, 0
      %p140 = por %p138, %p139
      %s142 = sadd.s32 %s141, 1
      %p145 = scmp.eq.s32.totalorder %s25, 1
      %p146 = scmp.ne.s32.totalorder %s141, %s143
      %p147 = scmp.eq.s32.totalorder %s25, 0
      %p148 = por %p146, %p147
      %p149 = scmp.ne.s32.totalorder %s141, %s143
      %p150 = scmp.eq.s32.totalorder %s30, 1
      %p151 = por %p149, %p150
      %p152 = scmp.ne.s32.totalorder %s143, %s144
      %p153 = scmp.eq.s32.totalorder %s30, 0
      %p154 = por %p152, %p153
      %p155 = scmp.ne.s32.totalorder %s143, %s144
      %p156 = scmp.eq.s32.totalorder %s31, 1
      %p157 = por %p155, %p156
      %p159 = scmp.ne.s32.totalorder %s144, %s158
      %p160 = scmp.eq.s32.totalorder %s31, 0
      %p161 = por %p159, %p160
      %s163 = sadd.s32 %s162, 1
      %p166 = scmp.eq.s32.totalorder %s25, 1
      %p167 = scmp.ne.s32.totalorder %s162, %s164
      %p168 = scmp.eq.s32.totalorder %s25, 0
      %p169 = por %p167, %p168
      %p170 = scmp.ne.s32.totalorder %s162, %s164
      %p171 = scmp.eq.s32.totalorder %s30, 1
      %p172 = por %p170, %p171
      %p173 = scmp.ne.s32.totalorder %s164, %s165
      %p174 = scmp.eq.s32.totalorder %s30, 0
      %p175 = por %p173, %p174
      %p176 = scmp.ne.s32.totalorder %s164, %s165
      %p177 = scmp.eq.s32.totalorder %s31, 1
      %p178 = por %p176, %p177
      %p180 = scmp.ne.s32.totalorder %s165, %s179
      %p181 = scmp.eq.s32.totalorder %s31, 0
      %p182 = por %p180, %p181
      %s184 = sadd.s32 %s183, 1
      %p187 = scmp.eq.s32.totalorder %s25, 1
      %p188 = scmp.ne.s32.totalorder %s183, %s185
      %p189 = scmp.eq.s32.totalorder %s25, 0
      %p190 = por %p188, %p189
      %p191 = scmp.ne.s32.totalorder %s183, %s185
      %p192 = scmp.eq.s32.totalorder %s30, 1
      %p193 = por %p191, %p192
      %p194 = scmp.ne.s32.totalorder %s185, %s186
      %p195 = scmp.eq.s32.totalorder %s30, 0
      %p196 = por %p194, %p195
      %p197 = scmp.ne.s32.totalorder %s185, %s186
      %p198 = scmp.eq.s32.totalorder %s31, 1
      %p199 = por %p197, %p198
      %p201 = scmp.ne.s32.totalorder %s186, %s200
      %p202 = scmp.eq.s32.totalorder %s31, 0
      %p203 = por %p201, %p202
      %s205 = sadd.s32 %s204, 1
      %p208 = scmp.eq.s32.totalorder %s25, 1
      %p209 = scmp.ne.s32.totalorder %s204, %s206
      %p210 = scmp.eq.s32.totalorder %s25, 0
      %p211 = por %p209, %p210
      %p212 = scmp.ne.s32.totalorder %s204, %s206
      %p213 = scmp.eq.s32.totalorder %s30, 1
      %p214 = por %p212, %p213
      %p215 = scmp.ne.s32.totalorder %s206, %s207
      %p216 = scmp.eq.s32.totalorder %s30, 0
      %p217 = por %p215, %p216
      %p218 = scmp.ne.s32.totalorder %s206, %s207
      %p219 = scmp.eq.s32.totalorder %s31, 1
      %p220 = por %p218, %p219
      %p222 = scmp.ne.s32.totalorder %s207, %s221
      %p223 = scmp.eq.s32.totalorder %s31, 0
      %p224 = por %p222, %p223
      %s226 = sadd.s32 %s225, 1
      %p229 = scmp.eq.s32.totalorder %s25, 1
      %p230 = scmp.ne.s32.totalorder %s225, %s227
      %p231 = scmp.eq.s32.totalorder %s25, 0
      %p232 = por %p230, %p231
      %p233 = scmp.ne.s32.totalorder %s225, %s227
      %p234 = scmp.eq.s32.totalorder %s30, 1
      %p235 = por %p233, %p234
      %p236 = scmp.ne.s32.totalorder %s227, %s228
      %p237 = scmp.eq.s32.totalorder %s30, 0
      %p238 = por %p236, %p237
      %p239 = scmp.ne.s32.totalorder %s227, %s228
      %p240 = scmp.eq.s32.totalorder %s31, 1
      %p241 = por %p239, %p240
      %p243 = scmp.ne.s32.totalorder %s228, %s242
      %p244 = scmp.eq.s32.totalorder %s31, 0
      %p245 = por %p243, %p244
      %s247 = sadd.s32 %s246, 1
      %p250 = scmp.eq.s32.totalorder %s25, 1
      %p251 = scmp.ne.s32.totalorder %s246, %s248
      %p252 = scmp.eq.s32.totalorder %s25, 0
      %p253 = por %p251, %p252
      %p254 = scmp.ne.s32.totalorder %s246, %s248
      %p255 = scmp.eq.s32.totalorder %s30, 1
      %p256 = por %p254, %p255
      %p257 = scmp.ne.s32.totalorder %s248, %s249
      %p258 = scmp.eq.s32.totalorder %s30, 0
      %p259 = por %p257, %p258
      %p260 = scmp.ne.s32.totalorder %s248, %s249
      %p261 = scmp.eq.s32.totalorder %s31, 1
      %p262 = por %p260, %p261
      %p264 = scmp.ne.s32.totalorder %s249, %s263
      %p265 = scmp.eq.s32.totalorder %s31, 0
      %p266 = por %p264, %p265
      %s268 = sadd.s32 %s267, 1
      %p271 = scmp.eq.s32.totalorder %s25, 1
      %p272 = scmp.ne.s32.totalorder %s267, %s269
      %p273 = scmp.eq.s32.totalorder %s25, 0
      %p274 = por %p272, %p273
      %p275 = scmp.ne.s32.totalorder %s267, %s269
      %p276 = scmp.eq.s32.totalorder %s30, 1
      %p277 = por %p275, %p276
      %p278 = scmp.ne.s32.totalorder %s269, %s270
      %p279 = scmp.eq.s32.totalorder %s30, 0
      %p280 = por %p278, %p279
      %p281 = scmp.ne.s32.totalorder %s269, %s270
      %p282 = scmp.eq.s32.totalorder %s31, 1
      %p283 = por %p281, %p282
      %p285 = scmp.ne.s32.totalorder %s270, %s284
      %p286 = scmp.eq.s32.totalorder %s31, 0
      %p287 = por %p285, %p286
      %s289 = sadd.s32 %s288, 1
      %p292 = scmp.eq.s32.totalorder %s25, 1
      %p293 = scmp.ne.s32.totalorder %s288, %s290
      %p294 = scmp.eq.s32.totalorder %s25, 0
      %p295 = por %p293, %p294
      %p296 = scmp.ne.s32.totalorder %s288, %s290
      %p297 = scmp.eq.s32.totalorder %s30, 1
      %p298 = por %p296, %p297
      %p299 = scmp.ne.s32.totalorder %s290, %s291
      %p300 = scmp.eq.s32.totalorder %s30, 0
      %p301 = por %p299, %p300
      %p302 = scmp.ne.s32.totalorder %s290, %s291
      %p303 = scmp.eq.s32.totalorder %s31, 1
      %p304 = por %p302, %p303
      %p306 = scmp.ne.s32.totalorder %s291, %s305
      %p307 = scmp.eq.s32.totalorder %s31, 0
      %p308 = por %p306, %p307
      %s310 = sadd.s32 %s309, 1
      %p313 = scmp.eq.s32.totalorder %s25, 1
      %p314 = scmp.ne.s32.totalorder %s309, %s311
      %p315 = scmp.eq.s32.totalorder %s25, 0
      %p316 = por %p314, %p315
      %p317 = scmp.ne.s32.totalorder %s309, %s311
      %p318 = scmp.eq.s32.totalorder %s30, 1
      %p319 = por %p317, %p318
      %p320 = scmp.ne.s32.totalorder %s311, %s312
      %p321 = scmp.eq.s32.totalorder %s30, 0
      %p322 = por %p320, %p321
      %p323 = scmp.ne.s32.totalorder %s311, %s312
      %p324 = scmp.eq.s32.totalorder %s31, 1
      %p325 = por %p323, %p324
      %p327 = scmp.ne.s32.totalorder %s312, %s326
      %p328 = scmp.eq.s32.totalorder %s31, 0
      %p329 = por %p327, %p328
      %s331 = sadd.s32 %s330, 1
      %p334 = scmp.eq.s32.totalorder %s25, 1
      %p335 = scmp.ne.s32.totalorder %s330, %s332
      %p336 = scmp.eq.s32.totalorder %s25, 0
      %p337 = por %p335, %p336
      %p338 = scmp.ne.s32.totalorder %s330, %s332
      %p339 = scmp.eq.s32.totalorder %s30, 1
      %p340 = por %p338, %p339
      %p341 = scmp.ne.s32.totalorder %s332, %s333
      %p342 = scmp.eq.s32.totalorder %s30, 0
      %p343 = por %p341, %p342
      %p344 = scmp.ne.s32.totalorder %s332, %s333
      %p345 = scmp.eq.s32.totalorder %s31, 1
      %p346 = por %p344, %p345
      %p348 = scmp.ne.s32.totalorder %s333, %s347
      %p349 = scmp.eq.s32.totalorder %s31, 0
      %p350 = por %p348, %p349
      %s352 = sadd.s32 %s351, 1
      %p355 = scmp.eq.s32.totalorder %s25, 1
      %p356 = scmp.ne.s32.totalorder %s351, %s353
      %p357 = scmp.eq.s32.totalorder %s25, 0
      %p358 = por %p356, %p357
      %p359 = scmp.ne.s32.totalorder %s351, %s353
      %p360 = scmp.eq.s32.totalorder %s30, 1
      %p361 = por %p359, %p360
      %p362 = scmp.ne.s32.totalorder %s353, %s354
      %p363 = scmp.eq.s32.totalorder %s30, 0
      %p364 = por %p362, %p363
      %p365 = scmp.ne.s32.totalorder %s353, %s354
      %p366 = scmp.eq.s32.totalorder %s31, 1
      %p367 = por %p365, %p366
      %p369 = scmp.ne.s32.totalorder %s354, %s368
      %p370 = scmp.eq.s32.totalorder %s31, 0
      %p371 = por %p369, %p370
      %s373 = sadd.s32 %s372, 1
      %p376 = scmp.eq.s32.totalorder %s25, 1
      %p377 = scmp.ne.s32.totalorder %s372, %s374
      %p378 = scmp.eq.s32.totalorder %s25, 0
      %p379 = por %p377, %p378
      %p380 = scmp.ne.s32.totalorder %s372, %s374
      %p381 = scmp.eq.s32.totalorder %s30, 1
      %p382 = por %p380, %p381
      %p383 = scmp.ne.s32.totalorder %s374, %s375
      %p384 = scmp.eq.s32.totalorder %s30, 0
      %p385 = por %p383, %p384
      %p386 = scmp.ne.s32.totalorder %s374, %s375
      %p387 = scmp.eq.s32.totalorder %s31, 1
      %p388 = por %p386, %p387
      %p390 = scmp.ne.s32.totalorder %s375, %s389
      %p391 = scmp.eq.s32.totalorder %s31, 0
      %p392 = por %p390, %p391
      %s393 = ssub.s32 %s32, %s44
      %s394 = ssub.s32 %s33, %s40
      %s395 = sor.u32 %s393, %s394
      %p396 = scmp.eq.s32.totalorder %s395, 0
      %s398 = sadd.s32 %s397, 1
      %s399 = scalar_select %p396, %s397, %s398
      %p402 = pneg %p396
      %p403 = scmp.eq.s32.totalorder %s25, 1
      %p404 = por %p402, %p403
      %p405 = scmp.ne.s32.totalorder %s397, %s400
      %p406 = scmp.eq.s32.totalorder %s25, 0
      %p407 = por %p405, %p406
      %p408 = scmp.ne.s32.totalorder %s397, %s400
      %p409 = scmp.eq.s32.totalorder %s30, 1
      %p410 = por %p408, %p409
      %p411 = scmp.ne.s32.totalorder %s400, %s401
      %p412 = scmp.eq.s32.totalorder %s30, 0
      %p413 = por %p411, %p412
      %p414 = scmp.ne.s32.totalorder %s400, %s401
      %p415 = scmp.eq.s32.totalorder %s31, 1
      %p416 = por %p414, %p415
      %p418 = scmp.ne.s32.totalorder %s401, %s417
      %p419 = scmp.eq.s32.totalorder %s31, 0
      %p420 = por %p418, %p419
      %p421 = scmp.le.s32.totalorder 1, %s25
      %p422 = scmp.lt.s32.totalorder %s25, 3
      %p423 = pnand %p421, %p422
      %p424 = pneg %p423
      // Predicated region
      $region9: #{tpu_custom_call.1} parent=5 // pred_check
        _
      $region10: #{tpu_custom_call.1} parent=5 // pred_check_branch
        %426 = sbr.rel (%p423) target = $region12
      $region11: #{tpu_custom_call.1} parent=5 // pred_region
        %s427 = ssub.s32 %s25, 1
        // Predicated region
        $region13: #{tpu_custom_call.1} parent=11 // pred_check
          %p428 = pneg %p112
        $region14: #{tpu_custom_call.1} parent=11 // pred_check_branch
          %430 = sbr.rel (%p428) target = $region16
        $region15: #{tpu_custom_call.1} parent=11 // pred_region
          _
        $region16: #{tpu_custom_call.1} parent=11 // pred_fallthru
          _
        // Predicated region
        $region17: #{tpu_custom_call.1} parent=11 // pred_check
          %p431 = pneg %p133
        $region18: #{tpu_custom_call.1} parent=11 // pred_check_branch
          %433 = sbr.rel (%p431) target = $region20
        $region19: #{tpu_custom_call.1} parent=11 // pred_region
          _
        $region20: #{tpu_custom_call.1} parent=11 // pred_fallthru
          _
        // Predicated region
        $region21: #{tpu_custom_call.1} parent=11 // pred_check
          %p434 = pneg %p154
        $region22: #{tpu_custom_call.1} parent=11 // pred_check_branch
          %436 = sbr.rel (%p434) target = $region24
        $region23: #{tpu_custom_call.1} parent=11 // pred_region
          _
        $region24: #{tpu_custom_call.1} parent=11 // pred_fallthru
          _
        // Predicated region
        $region25: #{tpu_custom_call.1} parent=11 // pred_check
          %p437 = pneg %p175
        $region26: #{tpu_custom_call.1} parent=11 // pred_check_branch
          %439 = sbr.rel (%p437) target = $region28
        $region27: #{tpu_custom_call.1} parent=11 // pred_region
          _
        $region28: #{tpu_custom_call.1} parent=11 // pred_fallthru
          _
        // Predicated region
        $region29: #{tpu_custom_call.1} parent=11 // pred_check
          %p440 = pneg %p196
        $region30: #{tpu_custom_call.1} parent=11 // pred_check_branch
          %442 = sbr.rel (%p440) target = $region32
        $region31: #{tpu_custom_call.1} parent=11 // pred_region
          _
        $region32: #{tpu_custom_call.1} parent=11 // pred_fallthru
          _
        // Predicated region
        $region33: #{tpu_custom_call.1} parent=11 // pred_check
          %p443 = pneg %p217
        $region34: #{tpu_custom_call.1} parent=11 // pred_check_branch
          %445 = sbr.rel (%p443) target = $region36
        $region35: #{tpu_custom_call.1} parent=11 // pred_region
          _
        $region36: #{tpu_custom_call.1} parent=11 // pred_fallthru
          _
        // Predicated region
        $region37: #{tpu_custom_call.1} parent=11 // pred_check
          %p446 = pneg %p238
        $region38: #{tpu_custom_call.1} parent=11 // pred_check_branch
          %448 = sbr.rel (%p446) target = $region40
        $region39: #{tpu_custom_call.1} parent=11 // pred_region
          _
        $region40: #{tpu_custom_call.1} parent=11 // pred_fallthru
          _
        // Predicated region
        $region41: #{tpu_custom_call.1} parent=11 // pred_check
          %p449 = pneg %p259
        $region42: #{tpu_custom_call.1} parent=11 // pred_check_branch
          %451 = sbr.rel (%p449) target = $region44
        $region43: #{tpu_custom_call.1} parent=11 // pred_region
          _
        $region44: #{tpu_custom_call.1} parent=11 // pred_fallthru
          _
        // Predicated region
        $region45: #{tpu_custom_call.1} parent=11 // pred_check
          %p452 = pneg %p280
        $region46: #{tpu_custom_call.1} parent=11 // pred_check_branch
          %454 = sbr.rel (%p452) target = $region48
        $region47: #{tpu_custom_call.1} parent=11 // pred_region
          _
        $region48: #{tpu_custom_call.1} parent=11 // pred_fallthru
          _
        // Predicated region
        $region49: #{tpu_custom_call.1} parent=11 // pred_check
          %p455 = pneg %p301
        $region50: #{tpu_custom_call.1} parent=11 // pred_check_branch
          %457 = sbr.rel (%p455) target = $region52
        $region51: #{tpu_custom_call.1} parent=11 // pred_region
          _
        $region52: #{tpu_custom_call.1} parent=11 // pred_fallthru
          _
        // Predicated region
        $region53: #{tpu_custom_call.1} parent=11 // pred_check
          %p458 = pneg %p322
        $region54: #{tpu_custom_call.1} parent=11 // pred_check_branch
          %460 = sbr.rel (%p458) target = $region56
        $region55: #{tpu_custom_call.1} parent=11 // pred_region
          _
        $region56: #{tpu_custom_call.1} parent=11 // pred_fallthru
          _
        // Predicated region
        $region57: #{tpu_custom_call.1} parent=11 // pred_check
          %p461 = pneg %p343
        $region58: #{tpu_custom_call.1} parent=11 // pred_check_branch
          %463 = sbr.rel (%p461) target = $region60
        $region59: #{tpu_custom_call.1} parent=11 // pred_region
          _
        $region60: #{tpu_custom_call.1} parent=11 // pred_fallthru
          _
        // Predicated region
        $region61: #{tpu_custom_call.1} parent=11 // pred_check
          %p464 = pneg %p364
        $region62: #{tpu_custom_call.1} parent=11 // pred_check_branch
          %466 = sbr.rel (%p464) target = $region64
        $region63: #{tpu_custom_call.1} parent=11 // pred_region
          _
        $region64: #{tpu_custom_call.1} parent=11 // pred_fallthru
          _
        // Predicated region
        $region65: #{tpu_custom_call.1} parent=11 // pred_check
          %p467 = pneg %p385
        $region66: #{tpu_custom_call.1} parent=11 // pred_check_branch
          %469 = sbr.rel (%p467) target = $region68
        $region67: #{tpu_custom_call.1} parent=11 // pred_region
          _
        $region68: #{tpu_custom_call.1} parent=11 // pred_fallthru
          _
      $region12: #{tpu_custom_call.1} parent=5 // pred_fallthru
        _
      %p470 = scmp.lt.s32.totalorder %s25, 2
      // Predicated region
      $region69: #{tpu_custom_call.1} parent=5 // pred_check
        %p471 = pneg %p470
      $region70: #{tpu_custom_call.1} parent=5 // pred_check_branch
        %473 = sbr.rel (%p471) target = $region72
      $region71: #{tpu_custom_call.1} parent=5 // pred_region
        // Predicated region
        $region73: #{tpu_custom_call.1} parent=71 // pred_check
          %p474 = pneg %p59
        $region74: #{tpu_custom_call.1} parent=71 // pred_check_branch
          %476 = sbr.rel (%p474) target = $region76
        $region75: #{tpu_custom_call.1} parent=71 // pred_region
          %p477 = scmp.lt.s32.totalorder %s32, 1
          %s478 = scalar_select %p477, %s32, 1
          %p479 = scmp.lt.s32.totalorder %s33, 0
          %s480 = scalar_select %p479, %s33, 0
          %s481 = sadd.s32 %s480, %s478
          %s482 = smul.addr %s481, 8
          %s483 = scalar_lea.vmem %s0, %s482
        $region76: #{tpu_custom_call.1} parent=71 // pred_fallthru
          _
        // Predicated region
        $region77: #{tpu_custom_call.1} parent=71 // pred_check
          %p484 = pneg %p85
        $region78: #{tpu_custom_call.1} parent=71 // pred_check_branch
          %486 = sbr.rel (%p484) target = $region80
        $region79: #{tpu_custom_call.1} parent=71 // pred_region
          %p487 = scmp.lt.s32.totalorder %s32, 1
          %s488 = scalar_select %p487, %s32, 1
          %s489 = smul.addr %s488, 8
          %s490 = scalar_lea.vmem %s1, %s489
        $region80: #{tpu_custom_call.1} parent=71 // pred_fallthru
          _
      $region72: #{tpu_custom_call.1} parent=5 // pred_fallthru
        _
      %p491 = scmp.le.s32.totalorder 1, %s25
      %p492 = scmp.lt.s32.totalorder %s25, 3
      %p493 = pnand %p491, %p492
      %p494 = pneg %p493
      // Predicated region
      $region81: #{tpu_custom_call.1} parent=5 // pred_check
        _
      $region82: #{tpu_custom_call.1} parent=5 // pred_check_branch
        %496 = sbr.rel (%p493) target = $region84
      $region83: #{tpu_custom_call.1} parent=5 // pred_region
        %s497 = ssub.s32 %s25, 1
        %p498 = scmp.lt.s32.totalorder %s34, 1
        %s499 = scalar_select %p498, %s34, 1
        %p500 = scmp.lt.s32.totalorder %s35, 0
        %s501 = scalar_select %p500, %s35, 0
        %s502 = sadd.s32 %s501, %s499
        %s503 = smul.addr %s502, 8
        %s504 = scalar_lea.vmem %s0, %s503
        %p505 = pneg %p65
        %p506 = pneg %p62
        %p507 = scmp.lt.s32.totalorder %s34, 1
        %s508 = scalar_select %p507, %s34, 1
        %s509 = smul.addr %s508, 8
        %s510 = scalar_lea.vmem %s1, %s509
        %p511 = pneg %p91
        %p512 = pneg %p88
        %p513 = pneg %p112
        %p514 = pneg %p109
        %p515 = pneg %p133
        %p516 = pneg %p130
        %p517 = pneg %p154
        %p518 = pneg %p151
        %p519 = pneg %p175
        %p520 = pneg %p172
        %p521 = pneg %p196
        %p522 = pneg %p193
        %p523 = pneg %p217
        %p524 = pneg %p214
        %p525 = pneg %p238
        %p526 = pneg %p235
        %p527 = pneg %p259
        %p528 = pneg %p256
        %p529 = pneg %p280
        %p530 = pneg %p277
        %p531 = pneg %p301
        %p532 = pneg %p298
        %p533 = pneg %p322
        %p534 = pneg %p319
        %p535 = pneg %p343
        %p536 = pneg %p340
        %p537 = pneg %p364
        %p538 = pneg %p361
        %p539 = pneg %p385
        %p540 = pneg %p382
        %p541 = pneg %p413
        %p542 = pneg %p410
        %s543 = sand.u32 %s400, 1
        %s544 = scalar_lea.sflag [#allocation3], %s543
        %s545 = sand.u32 %s400, 1
        %s546 = smul.addr %s545, 8
        %s547 = scalar_lea.vmem [#allocation2], %s546
        %p548 = scmp.lt.s32.totalorder %s34, 1
        %s549 = scalar_select %p548, %s34, 1
        %p550 = scmp.lt.s32.totalorder %s35, 0
        %s551 = scalar_select %p550, %s35, 0
        %s552 = sadd.s32 %s551, %s549
        %s553 = smul.addr %s552, 8
        %s554 = scalar_lea.vmem %s0, %s553
        %p555 = scmp.lt.s32.totalorder %s34, 1
        %s556 = scalar_select %p555, %s34, 1
        %s557 = smul.addr %s556, 8
        %s558 = scalar_lea.vmem %s1, %s557
        %v559 = vld [vmem:[%s554] sm:$0xff]
        %v560 = vld [vmem:[%s2] sm:$0xff]
        %v561 = vld [vmem:[%s2 + $0x8] sm:$0xff]
        %v562 = vld [vmem:[%s2 + $0x10] sm:$0xff]
        %v563 = vld [vmem:[%s2 + $0x18] sm:$0xff]
        %v564 = vld [vmem:[%s3] sm:$0x1]
        %v566 = vlaneseq
        %v567 = vshrl.u32 %v566, 7
        %v568 = vsub.s32 0, %v567
        %v569 = vrot.slane %v564, %v568
        %vm571 = vcmask 261120
        %v573 = vsel %vm571, %v559, 0
        %575 = vmatprep.subr.mxu0 0.0
        %576 = vmatpush1.msra.mxu0 %v560
        %577 = vmatprep.subr.mxu0 0.0
        %578 = vmatpush1.msra.mxu0 %v561
        %579 = vmatprep.subr.mxu0 0.0
        %580 = vmatpush1.msra.mxu0 %v562
        %581 = vmatprep.subr.mxu0 0.0
        %582 = vmatpush1.msra.mxu0 %v563
        %583 = vmatprep.subr.mxu0 0.0
        %584 = vmatpush1.msra.mxu0 0.0
        %585 = vmatprep.subr.mxu0 0.0
        %586 = vmatpush1.msra.mxu0 0.0
        %587 = vmatprep.subr.mxu0 0.0
        %588 = vmatpush1.msra.mxu0 0.0
        %589 = vmatprep.subr.mxu0 0.0
        %590 = vmatpush1.msra.mxu0 0.0
        %591 = vmatprep.subr.mxu0 0.0
        %592 = vmatpush1.msra.mxu0 0.0
        %593 = vmatprep.subr.mxu0 0.0
        %594 = vmatpush1.msra.mxu0 0.0
        %595 = vmatprep.subr.mxu0 0.0
        %596 = vmatpush1.msra.mxu0 0.0
        %597 = vmatprep.subr.mxu0 0.0
        %598 = vmatpush1.msra.mxu0 0.0
        %599 = vmatprep.subr.mxu0 0.0
        %600 = vmatpush1.msra.mxu0 0.0
        %601 = vmatprep.subr.mxu0 0.0
        %602 = vmatpush1.msra.mxu0 0.0
        %603 = vmatprep.subr.mxu0 0.0
        %604 = vmatpush1.msra.mxu0 0.0
        %605 = vmatprep.subr.mxu0 0.0
        %606 = vmatpush1.msra.mxu0 0.0
        %607 = vmatprep.subr.mxu0 0.0
        %608 = vmatpush1.msra.mxu0 0.0
        %609 = vmatprep.subr.mxu0 0.0
        %610 = vmatpush1.msra.mxu0 0.0
        %611 = vmatprep.subr.mxu0 0.0
        %612 = vmatpush1.msra.mxu0 0.0
        %613 = vmatprep.subr.mxu0 0.0
        %614 = vmatpush1.msra.mxu0 0.0
        %615 = vmatprep.subr.mxu0 0.0
        %616 = vmatpush1.msra.mxu0 0.0
        %617 = vmatprep.subr.mxu0 0.0
        %618 = vmatpush1.msra.mxu0 0.0
        %619 = vmatprep.subr.mxu0 0.0
        %620 = vmatpush1.msra.mxu0 0.0
        %621 = vmatprep.subr.mxu0 0.0
        %622 = vmatpush1.msra.mxu0 0.0
        %623 = vmatprep.subr.mxu0 0.0
        %624 = vmatpush1.msra.mxu0 0.0
        %625 = vmatprep.subr.mxu0 0.0
        %626 = vmatpush1.msra.mxu0 0.0
        %627 = vmatprep.subr.mxu0 0.0
        %628 = vmatpush1.msra.mxu0 0.0
        %629 = vmatprep.subr.mxu0 0.0
        %630 = vmatpush1.msra.mxu0 0.0
        %631 = vmatprep.subr.mxu0 0.0
        %632 = vmatpush1.msra.mxu0 0.0
        %633 = vmatprep.subr.mxu0 0.0
        %634 = vmatpush1.msra.mxu0 0.0
        %635 = vmatprep.subr.mxu0 0.0
        %636 = vmatpush1.msra.mxu0 0.0
        %637 = vmatprep.subr.mxu0 0.0
        %638 = vmatpush1.msra.mxu0 0.0
        %639 = vmatprep.mubr.f32.mxu0 0.0
        %640 = vmatmul.mubr.f32.gmra.mrb[0].mxu0 %v573
        %v641 = vpop.f32.mrb[0].mxu0
        %v642 = vadd.f32 %v569, %v641
        %v643 = vpop.f32.mrb[0].mxu0
        %644 = vdwg.mxu0
        %v645 = vld [vmem:[%s558] sm:$0xff]
        %v646 = vld [vmem:[%s4] sm:$0xff]
        %v647 = vld [vmem:[%s4 + $0x8] sm:$0xff]
        %v648 = vld [vmem:[%s4 + $0x10] sm:$0xff]
        %v649 = vld [vmem:[%s4 + $0x18] sm:$0xff]
        %v650 = vld [vmem:[%s5] sm:$0x1]
        %v652 = vlaneseq
        %v653 = vshrl.u32 %v652, 7
        %v654 = vsub.s32 0, %v653
        %v655 = vrot.slane %v650, %v654
        %v658 = vsel %vm571, %v645, 0
        %660 = vmatprep.subr.mxu0 0.0
        %661 = vmatpush1.msra.mxu0 %v646
        %662 = vmatprep.subr.mxu0 0.0
        %663 = vmatpush1.msra.mxu0 %v647
        %664 = vmatprep.subr.mxu0 0.0
        %665 = vmatpush1.msra.mxu0 %v648
        %666 = vmatprep.subr.mxu0 0.0
        %667 = vmatpush1.msra.mxu0 %v649
        %668 = vmatprep.subr.mxu0 0.0
        %669 = vmatpush1.msra.mxu0 0.0
        %670 = vmatprep.subr.mxu0 0.0
        %671 = vmatpush1.msra.mxu0 0.0
        %672 = vmatprep.subr.mxu0 0.0
        %673 = vmatpush1.msra.mxu0 0.0
        %674 = vmatprep.subr.mxu0 0.0
        %675 = vmatpush1.msra.mxu0 0.0
        %676 = vmatprep.subr.mxu0 0.0
        %677 = vmatpush1.msra.mxu0 0.0
        %678 = vmatprep.subr.mxu0 0.0
        %679 = vmatpush1.msra.mxu0 0.0
        %680 = vmatprep.subr.mxu0 0.0
        %681 = vmatpush1.msra.mxu0 0.0
        %682 = vmatprep.subr.mxu0 0.0
        %683 = vmatpush1.msra.mxu0 0.0
        %684 = vmatprep.subr.mxu0 0.0
        %685 = vmatpush1.msra.mxu0 0.0
        %686 = vmatprep.subr.mxu0 0.0
        %687 = vmatpush1.msra.mxu0 0.0
        %688 = vmatprep.subr.mxu0 0.0
        %689 = vmatpush1.msra.mxu0 0.0
        %690 = vmatprep.subr.mxu0 0.0
        %691 = vmatpush1.msra.mxu0 0.0
        %692 = vmatprep.subr.mxu0 0.0
        %693 = vmatpush1.msra.mxu0 0.0
        %694 = vmatprep.subr.mxu0 0.0
        %695 = vmatpush1.msra.mxu0 0.0
        %696 = vmatprep.subr.mxu0 0.0
        %697 = vmatpush1.msra.mxu0 0.0
        %698 = vmatprep.subr.mxu0 0.0
        %699 = vmatpush1.msra.mxu0 0.0
        %700 = vmatprep.subr.mxu0 0.0
        %701 = vmatpush1.msra.mxu0 0.0
        %702 = vmatprep.subr.mxu0 0.0
        %703 = vmatpush1.msra.mxu0 0.0
        %704 = vmatprep.subr.mxu0 0.0
        %705 = vmatpush1.msra.mxu0 0.0
        %706 = vmatprep.subr.mxu0 0.0
        %707 = vmatpush1.msra.mxu0 0.0
        %708 = vmatprep.subr.mxu0 0.0
        %709 = vmatpush1.msra.mxu0 0.0
        %710 = vmatprep.subr.mxu0 0.0
        %711 = vmatpush1.msra.mxu0 0.0
        %712 = vmatprep.subr.mxu0 0.0
        %713 = vmatpush1.msra.mxu0 0.0
        %714 = vmatprep.subr.mxu0 0.0
        %715 = vmatpush1.msra.mxu0 0.0
        %716 = vmatprep.subr.mxu0 0.0
        %717 = vmatpush1.msra.mxu0 0.0
        %718 = vmatprep.subr.mxu0 0.0
        %719 = vmatpush1.msra.mxu0 0.0
        %720 = vmatprep.subr.mxu0 0.0
        %721 = vmatpush1.msra.mxu0 0.0
        %722 = vmatprep.subr.mxu0 0.0
        %723 = vmatpush1.msra.mxu0 0.0
        %724 = vmatprep.mubr.f32.mxu0 0.0
        %725 = vmatmul.mubr.f32.gmra.mrb[0].mxu0 %v658
        %v726 = vpop.f32.mrb[0].mxu0
        %v727 = vadd.f32 %v655, %v726
        %v728 = vpop.f32.mrb[0].mxu0
        %729 = vdwg.mxu0
        %731 = vrot.lane.b32.xlu0 %v642, 120
        %v732 = vpop.permute.xlu0 %731
        %734 = vrot.lane.b32.xlu0 %v642, 112
        %v735 = vpop.permute.xlu0 %734
        %737 = vrot.lane.b32.xlu0 %v642, 104
        %v738 = vpop.permute.xlu0 %737
        %v740 = vcombine.low %v642, %v735
        %v741 = vcombine.high %v642, %v735
        %v743 = vunpack.c.l.s4 1983009808
        %v744 = vunpack.c.0.s8 %v743
        %v745 = vlaneseq
        %v746 = vshrl.u32 %v745, 7
        %v747 = vsub.s32 %v744, %v746
        %v748 = vrot.slane %v740, %v747
        %v750 = vunpack.c.l.s4 1983009808
        %v751 = vunpack.c.0.s8 %v750
        %v752 = vlaneseq
        %v753 = vshrl.u32 %v752, 7
        %v754 = vsub.s32 %v751, %v753
        %v755 = vrot.slane %v741, %v754
        %v756 = vcombine.low %v732, %v738
        %v757 = vcombine.high %v732, %v738
        %v759 = vunpack.c.l.s4 1983009808
        %v760 = vunpack.c.0.s8 %v759
        %v761 = vlaneseq
        %v762 = vshrl.u32 %v761, 7
        %v763 = vsub.s32 %v760, %v762
        %v764 = vrot.slane %v756, %v763
        %v766 = vunpack.c.l.s4 1983009808
        %v767 = vunpack.c.0.s8 %v766
        %v768 = vlaneseq
        %v769 = vshrl.u32 %v768, 7
        %v770 = vsub.s32 %v767, %v769
        %v771 = vrot.slane %v757, %v770
        %v772 = vcombine.low %v748, %v764
        %v773 = vcombine.high %v748, %v764
        %v775 = vunpack.c.l.s4 1934713408
        %v776 = vunpack.c.0.s8 %v775
        %v777 = vlaneseq
        %v778 = vshrl.u32 %v777, 7
        %v779 = vsub.s32 %v776, %v778
        %v780 = vrot.slane %v772, %v779
        %v782 = vunpack.c.l.s4 1934713408
        %v783 = vunpack.c.0.s8 %v782
        %v784 = vlaneseq
        %v785 = vshrl.u32 %v784, 7
        %v786 = vsub.s32 %v783, %v785
        %v787 = vrot.slane %v773, %v786
        %v788 = vcombine.low %v755, %v771
        %v789 = vcombine.high %v755, %v771
        %v791 = vunpack.c.l.s4 1934713408
        %v792 = vunpack.c.0.s8 %v791
        %v793 = vlaneseq
        %v794 = vshrl.u32 %v793, 7
        %v795 = vsub.s32 %v792, %v794
        %v796 = vrot.slane %v788, %v795
        %v798 = vunpack.c.l.s4 1934713408
        %v799 = vunpack.c.0.s8 %v798
        %v800 = vlaneseq
        %v801 = vshrl.u32 %v800, 7
        %v802 = vsub.s32 %v799, %v801
        %v803 = vrot.slane %v789, %v802
        %v804 = vcombine.high %v780, 0.0
        %v805 = vcombine.high %v787, 0.0
        %v806 = vcombine.high %v796, 0.0
        %v807 = vcombine.high %v803, 0.0
        %v808 = vcombine.low %v780, %v787
        %v810 = vunpack.c.l.s4 1983009808
        %v811 = vunpack.c.0.s8 %v810
        %v812 = vlaneseq
        %v813 = vshrl.u32 %v812, 7
        %v814 = vsub.s32 %v811, %v813
        %v815 = vrot.slane %v808, %v814
        %v816 = vcombine.low %v804, %v805
        %v818 = vunpack.c.l.s4 1983009808
        %v819 = vunpack.c.0.s8 %v818
        %v820 = vlaneseq
        %v821 = vshrl.u32 %v820, 7
        %v822 = vsub.s32 %v819, %v821
        %v823 = vrot.slane %v816, %v822
        %v824 = vcombine.low %v796, %v803
        %v826 = vunpack.c.l.s4 1983009808
        %v827 = vunpack.c.0.s8 %v826
        %v828 = vlaneseq
        %v829 = vshrl.u32 %v828, 7
        %v830 = vsub.s32 %v827, %v829
        %v831 = vrot.slane %v824, %v830
        %v832 = vcombine.low %v806, %v807
        %v834 = vunpack.c.l.s4 1983009808
        %v835 = vunpack.c.0.s8 %v834
        %v836 = vlaneseq
        %v837 = vshrl.u32 %v836, 7
        %v838 = vsub.s32 %v835, %v837
        %v839 = vrot.slane %v832, %v838
        %v840 = vcombine.low %v815, %v823
        %v841 = vcombine.high %v815, %v823
        %v843 = vunpack.c.l.s4 1934713408
        %v844 = vunpack.c.0.s8 %v843
        %v845 = vlaneseq
        %v846 = vshrl.u32 %v845, 7
        %v847 = vsub.s32 %v844, %v846
        %v848 = vrot.slane %v840, %v847
        %v850 = vunpack.c.l.s4 1934713408
        %v851 = vunpack.c.0.s8 %v850
        %v852 = vlaneseq
        %v853 = vshrl.u32 %v852, 7
        %v854 = vsub.s32 %v851, %v853
        %v855 = vrot.slane %v841, %v854
        %v856 = vcombine.low %v831, %v839
        %v857 = vcombine.high %v831, %v839
        %v859 = vunpack.c.l.s4 1934713408
        %v860 = vunpack.c.0.s8 %v859
        %v861 = vlaneseq
        %v862 = vshrl.u32 %v861, 7
        %v863 = vsub.s32 %v860, %v862
        %v864 = vrot.slane %v856, %v863
        %v866 = vunpack.c.l.s4 1934713408
        %v867 = vunpack.c.0.s8 %v866
        %v868 = vlaneseq
        %v869 = vshrl.u32 %v868, 7
        %v870 = vsub.s32 %v867, %v869
        %v871 = vrot.slane %v857, %v870
        %v872 = vcombine.low %v848, %v864
        %v873 = vcombine.high %v848, %v864
        %v874 = vcombine.low %v855, %v871
        %v875 = vcombine.high %v855, %v871
        %877 = vrot.lane.b32.xlu0 %v727, 120
        %v878 = vpop.permute.xlu0 %877
        %880 = vrot.lane.b32.xlu0 %v727, 112
        %v881 = vpop.permute.xlu0 %880
        %883 = vrot.lane.b32.xlu0 %v727, 104
        %v884 = vpop.permute.xlu0 %883
        %v886 = vcombine.low %v727, %v881
        %v887 = vcombine.high %v727, %v881
        %v889 = vunpack.c.l.s4 1983009808
        %v890 = vunpack.c.0.s8 %v889
        %v891 = vlaneseq
        %v892 = vshrl.u32 %v891, 7
        %v893 = vsub.s32 %v890, %v892
        %v894 = vrot.slane %v886, %v893
        %v896 = vunpack.c.l.s4 1983009808
        %v897 = vunpack.c.0.s8 %v896
        %v898 = vlaneseq
        %v899 = vshrl.u32 %v898, 7
        %v900 = vsub.s32 %v897, %v899
        %v901 = vrot.slane %v887, %v900
        %v902 = vcombine.low %v878, %v884
        %v903 = vcombine.high %v878, %v884
        %v905 = vunpack.c.l.s4 1983009808
        %v906 = vunpack.c.0.s8 %v905
        %v907 = vlaneseq
        %v908 = vshrl.u32 %v907, 7
        %v909 = vsub.s32 %v906, %v908
        %v910 = vrot.slane %v902, %v909
        %v912 = vunpack.c.l.s4 1983009808
        %v913 = vunpack.c.0.s8 %v912
        %v914 = vlaneseq
        %v915 = vshrl.u32 %v914, 7
        %v916 = vsub.s32 %v913, %v915
        %v917 = vrot.slane %v903, %v916
        %v918 = vcombine.low %v894, %v910
        %v919 = vcombine.high %v894, %v910
        %v921 = vunpack.c.l.s4 1934713408
        %v922 = vunpack.c.0.s8 %v921
        %v923 = vlaneseq
        %v924 = vshrl.u32 %v923, 7
        %v925 = vsub.s32 %v922, %v924
        %v926 = vrot.slane %v918, %v925
        %v928 = vunpack.c.l.s4 1934713408
        %v929 = vunpack.c.0.s8 %v928
        %v930 = vlaneseq
        %v931 = vshrl.u32 %v930, 7
        %v932 = vsub.s32 %v929, %v931
        %v933 = vrot.slane %v919, %v932
        %v934 = vcombine.low %v901, %v917
        %v935 = vcombine.high %v901, %v917
        %v937 = vunpack.c.l.s4 1934713408
        %v938 = vunpack.c.0.s8 %v937
        %v939 = vlaneseq
        %v940 = vshrl.u32 %v939, 7
        %v941 = vsub.s32 %v938, %v940
        %v942 = vrot.slane %v934, %v941
        %v944 = vunpack.c.l.s4 1934713408
        %v945 = vunpack.c.0.s8 %v944
        %v946 = vlaneseq
        %v947 = vshrl.u32 %v946, 7
        %v948 = vsub.s32 %v945, %v947
        %v949 = vrot.slane %v935, %v948
        %v950 = vcombine.high %v926, 0.0
        %v951 = vcombine.high %v933, 0.0
        %v952 = vcombine.high %v942, 0.0
        %v953 = vcombine.high %v949, 0.0
        %v954 = vcombine.low %v926, %v933
        %v956 = vunpack.c.l.s4 1983009808
        %v957 = vunpack.c.0.s8 %v956
        %v958 = vlaneseq
        %v959 = vshrl.u32 %v958, 7
        %v960 = vsub.s32 %v957, %v959
        %v961 = vrot.slane %v954, %v960
        %v962 = vcombine.low %v950, %v951
        %v964 = vunpack.c.l.s4 1983009808
        %v965 = vunpack.c.0.s8 %v964
        %v966 = vlaneseq
        %v967 = vshrl.u32 %v966, 7
        %v968 = vsub.s32 %v965, %v967
        %v969 = vrot.slane %v962, %v968
        %v970 = vcombine.low %v942, %v949
        %v972 = vunpack.c.l.s4 1983009808
        %v973 = vunpack.c.0.s8 %v972
        %v974 = vlaneseq
        %v975 = vshrl.u32 %v974, 7
        %v976 = vsub.s32 %v973, %v975
        %v977 = vrot.slane %v970, %v976
        %v978 = vcombine.low %v952, %v953
        %v980 = vunpack.c.l.s4 1983009808
        %v981 = vunpack.c.0.s8 %v980
        %v982 = vlaneseq
        %v983 = vshrl.u32 %v982, 7
        %v984 = vsub.s32 %v981, %v983
        %v985 = vrot.slane %v978, %v984
        %v986 = vcombine.low %v961, %v969
        %v987 = vcombine.high %v961, %v969
        %v989 = vunpack.c.l.s4 1934713408
        %v990 = vunpack.c.0.s8 %v989
        %v991 = vlaneseq
        %v992 = vshrl.u32 %v991, 7
        %v993 = vsub.s32 %v990, %v992
        %v994 = vrot.slane %v986, %v993
        %v996 = vunpack.c.l.s4 1934713408
        %v997 = vunpack.c.0.s8 %v996
        %v998 = vlaneseq
        %v999 = vshrl.u32 %v998, 7
        %v1000 = vsub.s32 %v997, %v999
        %v1001 = vrot.slane %v987, %v1000
        %v1002 = vcombine.low %v977, %v985
        %v1003 = vcombine.high %v977, %v985
        %v1005 = vunpack.c.l.s4 1934713408
        %v1006 = vunpack.c.0.s8 %v1005
        %v1007 = vlaneseq
        %v1008 = vshrl.u32 %v1007, 7
        %v1009 = vsub.s32 %v1006, %v1008
        %v1010 = vrot.slane %v1002, %v1009
        %v1012 = vunpack.c.l.s4 1934713408
        %v1013 = vunpack.c.0.s8 %v1012
        %v1014 = vlaneseq
        %v1015 = vshrl.u32 %v1014, 7
        %v1016 = vsub.s32 %v1013, %v1015
        %v1017 = vrot.slane %v1003, %v1016
        %v1018 = vcombine.low %v994, %v1010
        %v1019 = vcombine.high %v994, %v1010
        %v1020 = vcombine.low %v1001, %v1017
        %v1021 = vcombine.high %v1001, %v1017
        %1022 = vrot.lane.b32.xlu0 %v727, 96
        %v1023 = vpop.permute.xlu0 %1022
        %1024 = vrot.lane.b32.xlu0 %v878, 96
        %v1025 = vpop.permute.xlu0 %1024
        %1026 = vrot.lane.b32.xlu0 %v881, 96
        %v1027 = vpop.permute.xlu0 %1026
        %1028 = vrot.lane.b32.xlu0 %v884, 96
        %v1029 = vpop.permute.xlu0 %1028
        %v1034 = vcombine.low %v1023, %v1027
        %v1035 = vcombine.high %v1023, %v1027
        %v1037 = vunpack.c.l.s4 1983009808
        %v1038 = vunpack.c.0.s8 %v1037
        %v1039 = vlaneseq
        %v1040 = vshrl.u32 %v1039, 7
        %v1041 = vsub.s32 %v1038, %v1040
        %v1042 = vrot.slane %v1034, %v1041
        %v1044 = vunpack.c.l.s4 1983009808
        %v1045 = vunpack.c.0.s8 %v1044
        %v1046 = vlaneseq
        %v1047 = vshrl.u32 %v1046, 7
        %v1048 = vsub.s32 %v1045, %v1047
        %v1049 = vrot.slane %v1035, %v1048
        %v1050 = vcombine.low %v1025, %v1029
        %v1051 = vcombine.high %v1025, %v1029
        %v1053 = vunpack.c.l.s4 1983009808
        %v1054 = vunpack.c.0.s8 %v1053
        %v1055 = vlaneseq
        %v1056 = vshrl.u32 %v1055, 7
        %v1057 = vsub.s32 %v1054, %v1056
        %v1058 = vrot.slane %v1050, %v1057
        %v1060 = vunpack.c.l.s4 1983009808
        %v1061 = vunpack.c.0.s8 %v1060
        %v1062 = vlaneseq
        %v1063 = vshrl.u32 %v1062, 7
        %v1064 = vsub.s32 %v1061, %v1063
        %v1065 = vrot.slane %v1051, %v1064
        %v1066 = vcombine.low %v1042, %v1058
        %v1067 = vcombine.high %v1042, %v1058
        %v1069 = vunpack.c.l.s4 1934713408
        %v1070 = vunpack.c.0.s8 %v1069
        %v1071 = vlaneseq
        %v1072 = vshrl.u32 %v1071, 7
        %v1073 = vsub.s32 %v1070, %v1072
        %v1074 = vrot.slane %v1066, %v1073
        %v1076 = vunpack.c.l.s4 1934713408
        %v1077 = vunpack.c.0.s8 %v1076
        %v1078 = vlaneseq
        %v1079 = vshrl.u32 %v1078, 7
        %v1080 = vsub.s32 %v1077, %v1079
        %v1081 = vrot.slane %v1067, %v1080
        %v1082 = vcombine.low %v1049, %v1065
        %v1083 = vcombine.high %v1049, %v1065
        %v1085 = vunpack.c.l.s4 1934713408
        %v1086 = vunpack.c.0.s8 %v1085
        %v1087 = vlaneseq
        %v1088 = vshrl.u32 %v1087, 7
        %v1089 = vsub.s32 %v1086, %v1088
        %v1090 = vrot.slane %v1082, %v1089
        %v1092 = vunpack.c.l.s4 1934713408
        %v1093 = vunpack.c.0.s8 %v1092
        %v1094 = vlaneseq
        %v1095 = vshrl.u32 %v1094, 7
        %v1096 = vsub.s32 %v1093, %v1095
        %v1097 = vrot.slane %v1083, %v1096
        %v1098 = vcombine.high %v1074, 0.0
        %v1099 = vcombine.high %v1081, 0.0
        %v1100 = vcombine.high %v1090, 0.0
        %v1101 = vcombine.high %v1097, 0.0
        %v1102 = vcombine.low %v1074, %v1081
        %v1104 = vunpack.c.l.s4 1983009808
        %v1105 = vunpack.c.0.s8 %v1104
        %v1106 = vlaneseq
        %v1107 = vshrl.u32 %v1106, 7
        %v1108 = vsub.s32 %v1105, %v1107
        %v1109 = vrot.slane %v1102, %v1108
        %v1110 = vcombine.low %v1098, %v1099
        %v1112 = vunpack.c.l.s4 1983009808
        %v1113 = vunpack.c.0.s8 %v1112
        %v1114 = vlaneseq
        %v1115 = vshrl.u32 %v1114, 7
        %v1116 = vsub.s32 %v1113, %v1115
        %v1117 = vrot.slane %v1110, %v1116
        %v1118 = vcombine.low %v1090, %v1097
        %v1120 = vunpack.c.l.s4 1983009808
        %v1121 = vunpack.c.0.s8 %v1120
        %v1122 = vlaneseq
        %v1123 = vshrl.u32 %v1122, 7
        %v1124 = vsub.s32 %v1121, %v1123
        %v1125 = vrot.slane %v1118, %v1124
        %v1126 = vcombine.low %v1100, %v1101
        %v1128 = vunpack.c.l.s4 1983009808
        %v1129 = vunpack.c.0.s8 %v1128
        %v1130 = vlaneseq
        %v1131 = vshrl.u32 %v1130, 7
        %v1132 = vsub.s32 %v1129, %v1131
        %v1133 = vrot.slane %v1126, %v1132
        %v1134 = vcombine.low %v1109, %v1117
        %v1135 = vcombine.high %v1109, %v1117
        %v1137 = vunpack.c.l.s4 1934713408
        %v1138 = vunpack.c.0.s8 %v1137
        %v1139 = vlaneseq
        %v1140 = vshrl.u32 %v1139, 7
        %v1141 = vsub.s32 %v1138, %v1140
        %v1142 = vrot.slane %v1134, %v1141
        %v1144 = vunpack.c.l.s4 1934713408
        %v1145 = vunpack.c.0.s8 %v1144
        %v1146 = vlaneseq
        %v1147 = vshrl.u32 %v1146, 7
        %v1148 = vsub.s32 %v1145, %v1147
        %v1149 = vrot.slane %v1135, %v1148
        %v1150 = vcombine.low %v1125, %v1133
        %v1151 = vcombine.high %v1125, %v1133
        %v1153 = vunpack.c.l.s4 1934713408
        %v1154 = vunpack.c.0.s8 %v1153
        %v1155 = vlaneseq
        %v1156 = vshrl.u32 %v1155, 7
        %v1157 = vsub.s32 %v1154, %v1156
        %v1158 = vrot.slane %v1150, %v1157
        %v1160 = vunpack.c.l.s4 1934713408
        %v1161 = vunpack.c.0.s8 %v1160
        %v1162 = vlaneseq
        %v1163 = vshrl.u32 %v1162, 7
        %v1164 = vsub.s32 %v1161, %v1163
        %v1165 = vrot.slane %v1151, %v1164
        %v1166 = vcombine.low %v1142, %v1158
        %v1167 = vcombine.high %v1142, %v1158
        %v1168 = vcombine.low %v1149, %v1165
        %v1169 = vcombine.high %v1149, %v1165
        %vm1170 = vcmask 64512
        %v1172 = vsel %vm1170, %v872, 0
        %v1175 = vsel %vm1170, %v1018, 0
        %1177 = vmatprep.subr.mxu0 0.0
        %1178 = vmatpush1.xpose.msra.mxu0 %v1175
        %1179 = vmatprep.subr.mxu0 0.0
        %1180 = vmatpush1.xpose.msra.mxu0 0.0
        %1181 = vmatprep.subr.mxu0 0.0
        %1182 = vmatpush1.xpose.msra.mxu0 0.0
        %1183 = vmatprep.subr.mxu0 0.0
        %1184 = vmatpush1.xpose.msra.mxu0 0.0
        %1185 = vmatprep.subr.mxu0 0.0
        %1186 = vmatpush1.xpose.msra.mxu0 0.0
        %1187 = vmatprep.subr.mxu0 0.0
        %1188 = vmatpush1.xpose.msra.mxu0 0.0
        %1189 = vmatprep.subr.mxu0 0.0
        %1190 = vmatpush1.xpose.msra.mxu0 0.0
        %1191 = vmatprep.subr.mxu0 0.0
        %1192 = vmatpush1.xpose.msra.mxu0 0.0
        %1193 = vmatprep.subr.mxu0 0.0
        %1194 = vmatpush1.xpose.msra.mxu0 0.0
        %1195 = vmatprep.subr.mxu0 0.0
        %1196 = vmatpush1.xpose.msra.mxu0 0.0
        %1197 = vmatprep.subr.mxu0 0.0
        %1198 = vmatpush1.xpose.msra.mxu0 0.0
        %1199 = vmatprep.subr.mxu0 0.0
        %1200 = vmatpush1.xpose.msra.mxu0 0.0
        %1201 = vmatprep.subr.mxu0 0.0
        %1202 = vmatpush1.xpose.msra.mxu0 0.0
        %1203 = vmatprep.subr.mxu0 0.0
        %1204 = vmatpush1.xpose.msra.mxu0 0.0
        %1205 = vmatprep.subr.mxu0 0.0
        %1206 = vmatpush1.xpose.msra.mxu0 0.0
        %1207 = vmatprep.subr.mxu0 0.0
        %1208 = vmatpush1.xpose.msra.mxu0 0.0
        %1209 = vmatprep.subr.mxu0 0.0
        %1210 = vmatpush1.xpose.msra.mxu0 0.0
        %1211 = vmatprep.subr.mxu0 0.0
        %1212 = vmatpush1.xpose.msra.mxu0 0.0
        %1213 = vmatprep.subr.mxu0 0.0
        %1214 = vmatpush1.xpose.msra.mxu0 0.0
        %1215 = vmatprep.subr.mxu0 0.0
        %1216 = vmatpush1.xpose.msra.mxu0 0.0
        %1217 = vmatprep.subr.mxu0 0.0
        %1218 = vmatpush1.xpose.msra.mxu0 0.0
        %1219 = vmatprep.subr.mxu0 0.0
        %1220 = vmatpush1.xpose.msra.mxu0 0.0
        %1221 = vmatprep.subr.mxu0 0.0
        %1222 = vmatpush1.xpose.msra.mxu0 0.0
        %1223 = vmatprep.subr.mxu0 0.0
        %1224 = vmatpush1.xpose.msra.mxu0 0.0
        %1225 = vmatprep.subr.mxu0 0.0
        %1226 = vmatpush1.xpose.msra.mxu0 0.0
        %1227 = vmatprep.subr.mxu0 0.0
        %1228 = vmatpush1.xpose.msra.mxu0 0.0
        %1229 = vmatprep.subr.mxu0 0.0
        %1230 = vmatpush1.xpose.msra.mxu0 0.0
        %1231 = vmatprep.subr.mxu0 0.0
        %1232 = vmatpush1.xpose.msra.mxu0 0.0
        %1233 = vmatprep.subr.mxu0 0.0
        %1234 = vmatpush1.xpose.msra.mxu0 0.0
        %1235 = vmatprep.subr.mxu0 0.0
        %1236 = vmatpush1.xpose.msra.mxu0 0.0
        %1237 = vmatprep.subr.mxu0 0.0
        %1238 = vmatpush1.xpose.msra.mxu0 0.0
        %1239 = vmatprep.subr.mxu0 0.0
        %1240 = vmatpush1.xpose.msra.mxu0 0.0
        %1241 = vmatprep.mubr.f32.mxu0 0.0
        %1242 = vmatmul.mubr.f32.gmra.mrb[0].mxu0 %v1172
        %v1243 = vpop.f32.mrb[0].mxu0
        %v1244 = vadd.f32 0.0, %v1243
        %v1245 = vpop.f32.mrb[0].mxu0
        %1246 = vdwg.mxu0
        %v1248 = vsel %vm1170, %v873, 0
        %v1251 = vsel %vm1170, %v1019, 0
        %1253 = vmatprep.subr.mxu0 0.0
        %1254 = vmatpush1.xpose.msra.mxu0 %v1251
        %1255 = vmatprep.subr.mxu0 0.0
        %1256 = vmatpush1.xpose.msra.mxu0 0.0
        %1257 = vmatprep.subr.mxu0 0.0
        %1258 = vmatpush1.xpose.msra.mxu0 0.0
        %1259 = vmatprep.subr.mxu0 0.0
        %1260 = vmatpush1.xpose.msra.mxu0 0.0
        %1261 = vmatprep.subr.mxu0 0.0
        %1262 = vmatpush1.xpose.msra.mxu0 0.0
        %1263 = vmatprep.subr.mxu0 0.0
        %1264 = vmatpush1.xpose.msra.mxu0 0.0
        %1265 = vmatprep.subr.mxu0 0.0
        %1266 = vmatpush1.xpose.msra.mxu0 0.0
        %1267 = vmatprep.subr.mxu0 0.0
        %1268 = vmatpush1.xpose.msra.mxu0 0.0
        %1269 = vmatprep.subr.mxu0 0.0
        %1270 = vmatpush1.xpose.msra.mxu0 0.0
        %1271 = vmatprep.subr.mxu0 0.0
        %1272 = vmatpush1.xpose.msra.mxu0 0.0
        %1273 = vmatprep.subr.mxu0 0.0
        %1274 = vmatpush1.xpose.msra.mxu0 0.0
        %1275 = vmatprep.subr.mxu0 0.0
        %1276 = vmatpush1.xpose.msra.mxu0 0.0
        %1277 = vmatprep.subr.mxu0 0.0
        %1278 = vmatpush1.xpose.msra.mxu0 0.0
        %1279 = vmatprep.subr.mxu0 0.0
        %1280 = vmatpush1.xpose.msra.mxu0 0.0
        %1281 = vmatprep.subr.mxu0 0.0
        %1282 = vmatpush1.xpose.msra.mxu0 0.0
        %1283 = vmatprep.subr.mxu0 0.0
        %1284 = vmatpush1.xpose.msra.mxu0 0.0
        %1285 = vmatprep.subr.mxu0 0.0
        %1286 = vmatpush1.xpose.msra.mxu0 0.0
        %1287 = vmatprep.subr.mxu0 0.0
        %1288 = vmatpush1.xpose.msra.mxu0 0.0
        %1289 = vmatprep.subr.mxu0 0.0
        %1290 = vmatpush1.xpose.msra.mxu0 0.0
        %1291 = vmatprep.subr.mxu0 0.0
        %1292 = vmatpush1.xpose.msra.mxu0 0.0
        %1293 = vmatprep.subr.mxu0 0.0
        %1294 = vmatpush1.xpose.msra.mxu0 0.0
        %1295 = vmatprep.subr.mxu0 0.0
        %1296 = vmatpush1.xpose.msra.mxu0 0.0
        %1297 = vmatprep.subr.mxu0 0.0
        %1298 = vmatpush1.xpose.msra.mxu0 0.0
        %1299 = vmatprep.subr.mxu0 0.0
        %1300 = vmatpush1.xpose.msra.mxu0 0.0
        %1301 = vmatprep.subr.mxu0 0.0
        %1302 = vmatpush1.xpose.msra.mxu0 0.0
        %1303 = vmatprep.subr.mxu0 0.0
        %1304 = vmatpush1.xpose.msra.mxu0 0.0
        %1305 = vmatprep.subr.mxu0 0.0
        %1306 = vmatpush1.xpose.msra.mxu0 0.0
        %1307 = vmatprep.subr.mxu0 0.0
        %1308 = vmatpush1.xpose.msra.mxu0 0.0
        %1309 = vmatprep.subr.mxu0 0.0
        %1310 = vmatpush1.xpose.msra.mxu0 0.0
        %1311 = vmatprep.subr.mxu0 0.0
        %1312 = vmatpush1.xpose.msra.mxu0 0.0
        %1313 = vmatprep.subr.mxu0 0.0
        %1314 = vmatpush1.xpose.msra.mxu0 0.0
        %1315 = vmatprep.subr.mxu0 0.0
        %1316 = vmatpush1.xpose.msra.mxu0 0.0
        %1317 = vmatprep.mubr.f32.mxu0 0.0
        %1318 = vmatmul.mubr.f32.gmra.mrb[0].mxu0 %v1248
        %v1319 = vpop.f32.mrb[0].mxu0
        %v1320 = vadd.f32 0.0, %v1319
        %v1321 = vpop.f32.mrb[0].mxu0
        %1322 = vdwg.mxu0
        %v1324 = vsel %vm1170, %v874, 0
        %v1327 = vsel %vm1170, %v1020, 0
        %1329 = vmatprep.subr.mxu0 0.0
        %1330 = vmatpush1.xpose.msra.mxu0 %v1327
        %1331 = vmatprep.subr.mxu0 0.0
        %1332 = vmatpush1.xpose.msra.mxu0 0.0
        %1333 = vmatprep.subr.mxu0 0.0
        %1334 = vmatpush1.xpose.msra.mxu0 0.0
        %1335 = vmatprep.subr.mxu0 0.0
        %1336 = vmatpush1.xpose.msra.mxu0 0.0
        %1337 = vmatprep.subr.mxu0 0.0
        %1338 = vmatpush1.xpose.msra.mxu0 0.0
        %1339 = vmatprep.subr.mxu0 0.0
        %1340 = vmatpush1.xpose.msra.mxu0 0.0
        %1341 = vmatprep.subr.mxu0 0.0
        %1342 = vmatpush1.xpose.msra.mxu0 0.0
        %1343 = vmatprep.subr.mxu0 0.0
        %1344 = vmatpush1.xpose.msra.mxu0 0.0
        %1345 = vmatprep.subr.mxu0 0.0
        %1346 = vmatpush1.xpose.msra.mxu0 0.0
        %1347 = vmatprep.subr.mxu0 0.0
        %1348 = vmatpush1.xpose.msra.mxu0 0.0
        %1349 = vmatprep.subr.mxu0 0.0
        %1350 = vmatpush1.xpose.msra.mxu0 0.0
        %1351 = vmatprep.subr.mxu0 0.0
        %1352 = vmatpush1.xpose.msra.mxu0 0.0
        %1353 = vmatprep.subr.mxu0 0.0
        %1354 = vmatpush1.xpose.msra.mxu0 0.0
        %1355 = vmatprep.subr.mxu0 0.0
        %1356 = vmatpush1.xpose.msra.mxu0 0.0
        %1357 = vmatprep.subr.mxu0 0.0
        %1358 = vmatpush1.xpose.msra.mxu0 0.0
        %1359 = vmatprep.subr.mxu0 0.0
        %1360 = vmatpush1.xpose.msra.mxu0 0.0
        %1361 = vmatprep.subr.mxu0 0.0
        %1362 = vmatpush1.xpose.msra.mxu0 0.0
        %1363 = vmatprep.subr.mxu0 0.0
        %1364 = vmatpush1.xpose.msra.mxu0 0.0
        %1365 = vmatprep.subr.mxu0 0.0
        %1366 = vmatpush1.xpose.msra.mxu0 0.0
        %1367 = vmatprep.subr.mxu0 0.0
        %1368 = vmatpush1.xpose.msra.mxu0 0.0
        %1369 = vmatprep.subr.mxu0 0.0
        %1370 = vmatpush1.xpose.msra.mxu0 0.0
        %1371 = vmatprep.subr.mxu0 0.0
        %1372 = vmatpush1.xpose.msra.mxu0 0.0
        %1373 = vmatprep.subr.mxu0 0.0
        %1374 = vmatpush1.xpose.msra.mxu0 0.0
        %1375 = vmatprep.subr.mxu0 0.0
        %1376 = vmatpush1.xpose.msra.mxu0 0.0
        %1377 = vmatprep.subr.mxu0 0.0
        %1378 = vmatpush1.xpose.msra.mxu0 0.0
        %1379 = vmatprep.subr.mxu0 0.0
        %1380 = vmatpush1.xpose.msra.mxu0 0.0
        %1381 = vmatprep.subr.mxu0 0.0
        %1382 = vmatpush1.xpose.msra.mxu0 0.0
        %1383 = vmatprep.subr.mxu0 0.0
        %1384 = vmatpush1.xpose.msra.mxu0 0.0
        %1385 = vmatprep.subr.mxu0 0.0
        %1386 = vmatpush1.xpose.msra.mxu0 0.0
        %1387 = vmatprep.subr.mxu0 0.0
        %1388 = vmatpush1.xpose.msra.mxu0 0.0
        %1389 = vmatprep.subr.mxu0 0.0
        %1390 = vmatpush1.xpose.msra.mxu0 0.0
        %1391 = vmatprep.subr.mxu0 0.0
        %1392 = vmatpush1.xpose.msra.mxu0 0.0
        %1393 = vmatprep.mubr.f32.mxu0 0.0
        %1394 = vmatmul.mubr.f32.gmra.mrb[0].mxu0 %v1324
        %v1395 = vpop.f32.mrb[0].mxu0
        %v1396 = vadd.f32 0.0, %v1395
        %v1397 = vpop.f32.mrb[0].mxu0
        %1398 = vdwg.mxu0
        %v1400 = vsel %vm1170, %v875, 0
        %v1403 = vsel %vm1170, %v1021, 0
        %1405 = vmatprep.subr.mxu0 0.0
        %1406 = vmatpush1.xpose.msra.mxu0 %v1403
        %1407 = vmatprep.subr.mxu0 0.0
        %1408 = vmatpush1.xpose.msra.mxu0 0.0
        %1409 = vmatprep.subr.mxu0 0.0
        %1410 = vmatpush1.xpose.msra.mxu0 0.0
        %1411 = vmatprep.subr.mxu0 0.0
        %1412 = vmatpush1.xpose.msra.mxu0 0.0
        %1413 = vmatprep.subr.mxu0 0.0
        %1414 = vmatpush1.xpose.msra.mxu0 0.0
        %1415 = vmatprep.subr.mxu0 0.0
        %1416 = vmatpush1.xpose.msra.mxu0 0.0
        %1417 = vmatprep.subr.mxu0 0.0
        %1418 = vmatpush1.xpose.msra.mxu0 0.0
        %1419 = vmatprep.subr.mxu0 0.0
        %1420 = vmatpush1.xpose.msra.mxu0 0.0
        %1421 = vmatprep.subr.mxu0 0.0
        %1422 = vmatpush1.xpose.msra.mxu0 0.0
        %1423 = vmatprep.subr.mxu0 0.0
        %1424 = vmatpush1.xpose.msra.mxu0 0.0
        %1425 = vmatprep.subr.mxu0 0.0
        %1426 = vmatpush1.xpose.msra.mxu0 0.0
        %1427 = vmatprep.subr.mxu0 0.0
        %1428 = vmatpush1.xpose.msra.mxu0 0.0
        %1429 = vmatprep.subr.mxu0 0.0
        %1430 = vmatpush1.xpose.msra.mxu0 0.0
        %1431 = vmatprep.subr.mxu0 0.0
        %1432 = vmatpush1.xpose.msra.mxu0 0.0
        %1433 = vmatprep.subr.mxu0 0.0
        %1434 = vmatpush1.xpose.msra.mxu0 0.0
        %1435 = vmatprep.subr.mxu0 0.0
        %1436 = vmatpush1.xpose.msra.mxu0 0.0
        %1437 = vmatprep.subr.mxu0 0.0
        %1438 = vmatpush1.xpose.msra.mxu0 0.0
        %1439 = vmatprep.subr.mxu0 0.0
        %1440 = vmatpush1.xpose.msra.mxu0 0.0
        %1441 = vmatprep.subr.mxu0 0.0
        %1442 = vmatpush1.xpose.msra.mxu0 0.0
        %1443 = vmatprep.subr.mxu0 0.0
        %1444 = vmatpush1.xpose.msra.mxu0 0.0
        %1445 = vmatprep.subr.mxu0 0.0
        %1446 = vmatpush1.xpose.msra.mxu0 0.0
        %1447 = vmatprep.subr.mxu0 0.0
        %1448 = vmatpush1.xpose.msra.mxu0 0.0
        %1449 = vmatprep.subr.mxu0 0.0
        %1450 = vmatpush1.xpose.msra.mxu0 0.0
        %1451 = vmatprep.subr.mxu0 0.0
        %1452 = vmatpush1.xpose.msra.mxu0 0.0
        %1453 = vmatprep.subr.mxu0 0.0
        %1454 = vmatpush1.xpose.msra.mxu0 0.0
        %1455 = vmatprep.subr.mxu0 0.0
        %1456 = vmatpush1.xpose.msra.mxu0 0.0
        %1457 = vmatprep.subr.mxu0 0.0
        %1458 = vmatpush1.xpose.msra.mxu0 0.0
        %1459 = vmatprep.subr.mxu0 0.0
        %1460 = vmatpush1.xpose.msra.mxu0 0.0
        %1461 = vmatprep.subr.mxu0 0.0
        %1462 = vmatpush1.xpose.msra.mxu0 0.0
        %1463 = vmatprep.subr.mxu0 0.0
        %1464 = vmatpush1.xpose.msra.mxu0 0.0
        %1465 = vmatprep.subr.mxu0 0.0
        %1466 = vmatpush1.xpose.msra.mxu0 0.0
        %1467 = vmatprep.subr.mxu0 0.0
        %1468 = vmatpush1.xpose.msra.mxu0 0.0
        %1469 = vmatprep.mubr.f32.mxu0 0.0
        %1470 = vmatmul.mubr.f32.gmra.mrb[0].mxu0 %v1400
        %v1471 = vpop.f32.mrb[0].mxu0
        %v1472 = vadd.f32 0.0, %v1471
        %v1473 = vpop.f32.mrb[0].mxu0
        %1474 = vdwg.mxu0
        %v1475 = vsel %vm1170, %v1244, -inf
        %1476 = vmax.xlane.f32.xlu0 %v1475
        %v1477 = vpop.xlane.xlu0 %1476
        %v1478 = vsel %vm1170, %v1320, -inf
        %1479 = vmax.xlane.f32.xlu0 %v1478
        %v1480 = vpop.xlane.xlu0 %1479
        %v1481 = vsel %vm1170, %v1396, -inf
        %1482 = vmax.xlane.f32.xlu0 %v1481
        %v1483 = vpop.xlane.xlu0 %1482
        %v1484 = vsel %vm1170, %v1472, -inf
        %1485 = vmax.xlane.f32.xlu0 %v1484
        %v1486 = vpop.xlane.xlu0 %1485
        %v1487 = vsub.f32 %v1244, %v1477
        %v1488 = vsub.f32 %v1320, %v1480
        %v1489 = vsub.f32 %v1396, %v1483
        %v1490 = vsub.f32 %v1472, %v1486
        %v1491 = vmul.f32 %v1487, 1.442695
        %v1492 = vpow.pop %v1491
        %v1493 = vmul.f32 %v1488, 1.442695
        %v1494 = vpow.pop %v1493
        %v1495 = vmul.f32 %v1489, 1.442695
        %v1496 = vpow.pop %v1495
        %v1497 = vmul.f32 %v1490, 1.442695
        %v1498 = vpow.pop %v1497
        %v1499 = vsel %vm1170, %v1492, 0.0
        %1500 = vadd.xlane.f32.xlu0 %v1499
        %v1501 = vpop.xlane.xlu0 %1500
        %v1502 = vsel %vm1170, %v1494, 0.0
        %1503 = vadd.xlane.f32.xlu0 %v1502
        %v1504 = vpop.xlane.xlu0 %1503
        %v1505 = vsel %vm1170, %v1496, 0.0
        %1506 = vadd.xlane.f32.xlu0 %v1505
        %v1507 = vpop.xlane.xlu0 %1506
        %v1508 = vsel %vm1170, %v1498, 0.0
        %1509 = vadd.xlane.f32.xlu0 %v1508
        %v1510 = vpop.xlane.xlu0 %1509
        %v1511 = vrcp.pop %v1501
        %v1512 = vmul.f32 %v1492, %v1511
        %v1513 = vrcp.pop %v1504
        %v1514 = vmul.f32 %v1494, %v1513
        %v1515 = vrcp.pop %v1507
        %v1516 = vmul.f32 %v1496, %v1515
        %v1517 = vrcp.pop %v1510
        %v1518 = vmul.f32 %v1498, %v1517
        %v1520 = vsel %vm1170, %v1512, 0
        %1522 = vmatprep.subr.mxu0 0.0
        %1523 = vmatpush1.msra.mxu0 %v1166
        %1524 = vmatprep.subr.mxu0 0.0
        %1525 = vmatpush1.msra.mxu0 0.0
        %1526 = vmatprep.subr.mxu0 0.0
        %1527 = vmatpush1.msra.mxu0 0.0
        %1528 = vmatprep.subr.mxu0 0.0
        %1529 = vmatpush1.msra.mxu0 0.0
        %1530 = vmatprep.subr.mxu0 0.0
        %1531 = vmatpush1.msra.mxu0 0.0
        %1532 = vmatprep.subr.mxu0 0.0
        %1533 = vmatpush1.msra.mxu0 0.0
        %1534 = vmatprep.subr.mxu0 0.0
        %1535 = vmatpush1.msra.mxu0 0.0
        %1536 = vmatprep.subr.mxu0 0.0
        %1537 = vmatpush1.msra.mxu0 0.0
        %1538 = vmatprep.subr.mxu0 0.0
        %1539 = vmatpush1.msra.mxu0 0.0
        %1540 = vmatprep.subr.mxu0 0.0
        %1541 = vmatpush1.msra.mxu0 0.0
        %1542 = vmatprep.subr.mxu0 0.0
        %1543 = vmatpush1.msra.mxu0 0.0
        %1544 = vmatprep.subr.mxu0 0.0
        %1545 = vmatpush1.msra.mxu0 0.0
        %1546 = vmatprep.subr.mxu0 0.0
        %1547 = vmatpush1.msra.mxu0 0.0
        %1548 = vmatprep.subr.mxu0 0.0
        %1549 = vmatpush1.msra.mxu0 0.0
        %1550 = vmatprep.subr.mxu0 0.0
        %1551 = vmatpush1.msra.mxu0 0.0
        %1552 = vmatprep.subr.mxu0 0.0
        %1553 = vmatpush1.msra.mxu0 0.0
        %1554 = vmatprep.subr.mxu0 0.0
        %1555 = vmatpush1.msra.mxu0 0.0
        %1556 = vmatprep.subr.mxu0 0.0
        %1557 = vmatpush1.msra.mxu0 0.0
        %1558 = vmatprep.subr.mxu0 0.0
        %1559 = vmatpush1.msra.mxu0 0.0
        %1560 = vmatprep.subr.mxu0 0.0
        %1561 = vmatpush1.msra.mxu0 0.0
        %1562 = vmatprep.subr.mxu0 0.0
        %1563 = vmatpush1.msra.mxu0 0.0
        %1564 = vmatprep.subr.mxu0 0.0
        %1565 = vmatpush1.msra.mxu0 0.0
        %1566 = vmatprep.subr.mxu0 0.0
        %1567 = vmatpush1.msra.mxu0 0.0
        %1568 = vmatprep.subr.mxu0 0.0
        %1569 = vmatpush1.msra.mxu0 0.0
        %1570 = vmatprep.subr.mxu0 0.0
        %1571 = vmatpush1.msra.mxu0 0.0
        %1572 = vmatprep.subr.mxu0 0.0
        %1573 = vmatpush1.msra.mxu0 0.0
        %1574 = vmatprep.subr.mxu0 0.0
        %1575 = vmatpush1.msra.mxu0 0.0
        %1576 = vmatprep.subr.mxu0 0.0
        %1577 = vmatpush1.msra.mxu0 0.0
        %1578 = vmatprep.subr.mxu0 0.0
        %1579 = vmatpush1.msra.mxu0 0.0
        %1580 = vmatprep.subr.mxu0 0.0
        %1581 = vmatpush1.msra.mxu0 0.0
        %1582 = vmatprep.subr.mxu0 0.0
        %1583 = vmatpush1.msra.mxu0 0.0
        %1584 = vmatprep.subr.mxu0 0.0
        %1585 = vmatpush1.msra.mxu0 0.0
        %1586 = vmatprep.mubr.f32.mxu0 0.0
        %1587 = vmatmul.mubr.f32.gmra.mrb[0].mxu0 %v1520
        %v1588 = vpop.f32.mrb[0].mxu0
        %v1589 = vadd.f32 0.0, %v1588
        %v1590 = vpop.f32.mrb[0].mxu0
        %1591 = vdwg.mxu0
        %v1593 = vsel %vm1170, %v1514, 0
        %1595 = vmatprep.subr.mxu0 0.0
        %1596 = vmatpush1.msra.mxu0 %v1167
        %1597 = vmatprep.subr.mxu0 0.0
        %1598 = vmatpush1.msra.mxu0 0.0
        %1599 = vmatprep.subr.mxu0 0.0
        %1600 = vmatpush1.msra.mxu0 0.0
        %1601 = vmatprep.subr.mxu0 0.0
        %1602 = vmatpush1.msra.mxu0 0.0
        %1603 = vmatprep.subr.mxu0 0.0
        %1604 = vmatpush1.msra.mxu0 0.0
        %1605 = vmatprep.subr.mxu0 0.0
        %1606 = vmatpush1.msra.mxu0 0.0
        %1607 = vmatprep.subr.mxu0 0.0
        %1608 = vmatpush1.msra.mxu0 0.0
        %1609 = vmatprep.subr.mxu0 0.0
        %1610 = vmatpush1.msra.mxu0 0.0
        %1611 = vmatprep.subr.mxu0 0.0
        %1612 = vmatpush1.msra.mxu0 0.0
        %1613 = vmatprep.subr.mxu0 0.0
        %1614 = vmatpush1.msra.mxu0 0.0
        %1615 = vmatprep.subr.mxu0 0.0
        %1616 = vmatpush1.msra.mxu0 0.0
        %1617 = vmatprep.subr.mxu0 0.0
        %1618 = vmatpush1.msra.mxu0 0.0
        %1619 = vmatprep.subr.mxu0 0.0
        %1620 = vmatpush1.msra.mxu0 0.0
        %1621 = vmatprep.subr.mxu0 0.0
        %1622 = vmatpush1.msra.mxu0 0.0
        %1623 = vmatprep.subr.mxu0 0.0
        %1624 = vmatpush1.msra.mxu0 0.0
        %1625 = vmatprep.subr.mxu0 0.0
        %1626 = vmatpush1.msra.mxu0 0.0
        %1627 = vmatprep.subr.mxu0 0.0
        %1628 = vmatpush1.msra.mxu0 0.0
        %1629 = vmatprep.subr.mxu0 0.0
        %1630 = vmatpush1.msra.mxu0 0.0
        %1631 = vmatprep.subr.mxu0 0.0
        %1632 = vmatpush1.msra.mxu0 0.0
        %1633 = vmatprep.subr.mxu0 0.0
        %1634 = vmatpush1.msra.mxu0 0.0
        %1635 = vmatprep.subr.mxu0 0.0
        %1636 = vmatpush1.msra.mxu0 0.0
        %1637 = vmatprep.subr.mxu0 0.0
        %1638 = vmatpush1.msra.mxu0 0.0
        %1639 = vmatprep.subr.mxu0 0.0
        %1640 = vmatpush1.msra.mxu0 0.0
        %1641 = vmatprep.subr.mxu0 0.0
        %1642 = vmatpush1.msra.mxu0 0.0
        %1643 = vmatprep.subr.mxu0 0.0
        %1644 = vmatpush1.msra.mxu0 0.0
        %1645 = vmatprep.subr.mxu0 0.0
        %1646 = vmatpush1.msra.mxu0 0.0
        %1647 = vmatprep.subr.mxu0 0.0
        %1648 = vmatpush1.msra.mxu0 0.0
        %1649 = vmatprep.subr.mxu0 0.0
        %1650 = vmatpush1.msra.mxu0 0.0
        %1651 = vmatprep.subr.mxu0 0.0
        %1652 = vmatpush1.msra.mxu0 0.0
        %1653 = vmatprep.subr.mxu0 0.0
        %1654 = vmatpush1.msra.mxu0 0.0
        %1655 = vmatprep.subr.mxu0 0.0
        %1656 = vmatpush1.msra.mxu0 0.0
        %1657 = vmatprep.subr.mxu0 0.0
        %1658 = vmatpush1.msra.mxu0 0.0
        %1659 = vmatprep.mubr.f32.mxu0 0.0
        %1660 = vmatmul.mubr.f32.gmra.mrb[0].mxu0 %v1593
        %v1661 = vpop.f32.mrb[0].mxu0
        %v1662 = vadd.f32 0.0, %v1661
        %v1663 = vpop.f32.mrb[0].mxu0
        %1664 = vdwg.mxu0
        %v1666 = vsel %vm1170, %v1516, 0
        %1668 = vmatprep.subr.mxu0 0.0
        %1669 = vmatpush1.msra.mxu0 %v1168
        %1670 = vmatprep.subr.mxu0 0.0
        %1671 = vmatpush1.msra.mxu0 0.0
        %1672 = vmatprep.subr.mxu0 0.0
        %1673 = vmatpush1.msra.mxu0 0.0
        %1674 = vmatprep.subr.mxu0 0.0
        %1675 = vmatpush1.msra.mxu0 0.0
        %1676 = vmatprep.subr.mxu0 0.0
        %1677 = vmatpush1.msra.mxu0 0.0
        %1678 = vmatprep.subr.mxu0 0.0
        %1679 = vmatpush1.msra.mxu0 0.0
        %1680 = vmatprep.subr.mxu0 0.0
        %1681 = vmatpush1.msra.mxu0 0.0
        %1682 = vmatprep.subr.mxu0 0.0
        %1683 = vmatpush1.msra.mxu0 0.0
        %1684 = vmatprep.subr.mxu0 0.0
        %1685 = vmatpush1.msra.mxu0 0.0
        %1686 = vmatprep.subr.mxu0 0.0
        %1687 = vmatpush1.msra.mxu0 0.0
        %1688 = vmatprep.subr.mxu0 0.0
        %1689 = vmatpush1.msra.mxu0 0.0
        %1690 = vmatprep.subr.mxu0 0.0
        %1691 = vmatpush1.msra.mxu0 0.0
        %1692 = vmatprep.subr.mxu0 0.0
        %1693 = vmatpush1.msra.mxu0 0.0
        %1694 = vmatprep.subr.mxu0 0.0
        %1695 = vmatpush1.msra.mxu0 0.0
        %1696 = vmatprep.subr.mxu0 0.0
        %1697 = vmatpush1.msra.mxu0 0.0
        %1698 = vmatprep.subr.mxu0 0.0
        %1699 = vmatpush1.msra.mxu0 0.0
        %1700 = vmatprep.subr.mxu0 0.0
        %1701 = vmatpush1.msra.mxu0 0.0
        %1702 = vmatprep.subr.mxu0 0.0
        %1703 = vmatpush1.msra.mxu0 0.0
        %1704 = vmatprep.subr.mxu0 0.0
        %1705 = vmatpush1.msra.mxu0 0.0
        %1706 = vmatprep.subr.mxu0 0.0
        %1707 = vmatpush1.msra.mxu0 0.0
        %1708 = vmatprep.subr.mxu0 0.0
        %1709 = vmatpush1.msra.mxu0 0.0
        %1710 = vmatprep.subr.mxu0 0.0
        %1711 = vmatpush1.msra.mxu0 0.0
        %1712 = vmatprep.subr.mxu0 0.0
        %1713 = vmatpush1.msra.mxu0 0.0
        %1714 = vmatprep.subr.mxu0 0.0
        %1715 = vmatpush1.msra.mxu0 0.0
        %1716 = vmatprep.subr.mxu0 0.0
        %1717 = vmatpush1.msra.mxu0 0.0
        %1718 = vmatprep.subr.mxu0 0.0
        %1719 = vmatpush1.msra.mxu0 0.0
        %1720 = vmatprep.subr.mxu0 0.0
        %1721 = vmatpush1.msra.mxu0 0.0
        %1722 = vmatprep.subr.mxu0 0.0
        %1723 = vmatpush1.msra.mxu0 0.0
        %1724 = vmatprep.subr.mxu0 0.0
        %1725 = vmatpush1.msra.mxu0 0.0
        %1726 = vmatprep.subr.mxu0 0.0
        %1727 = vmatpush1.msra.mxu0 0.0
        %1728 = vmatprep.subr.mxu0 0.0
        %1729 = vmatpush1.msra.mxu0 0.0
        %1730 = vmatprep.subr.mxu0 0.0
        %1731 = vmatpush1.msra.mxu0 0.0
        %1732 = vmatprep.mubr.f32.mxu0 0.0
        %1733 = vmatmul.mubr.f32.gmra.mrb[0].mxu0 %v1666
        %v1734 = vpop.f32.mrb[0].mxu0
        %v1735 = vadd.f32 0.0, %v1734
        %v1736 = vpop.f32.mrb[0].mxu0
        %1737 = vdwg.mxu0
        %v1739 = vsel %vm1170, %v1518, 0
        %1741 = vmatprep.subr.mxu0 0.0
        %1742 = vmatpush1.msra.mxu0 %v1169
        %1743 = vmatprep.subr.mxu0 0.0
        %1744 = vmatpush1.msra.mxu0 0.0
        %1745 = vmatprep.subr.mxu0 0.0
        %1746 = vmatpush1.msra.mxu0 0.0
        %1747 = vmatprep.subr.mxu0 0.0
        %1748 = vmatpush1.msra.mxu0 0.0
        %1749 = vmatprep.subr.mxu0 0.0
        %1750 = vmatpush1.msra.mxu0 0.0
        %1751 = vmatprep.subr.mxu0 0.0
        %1752 = vmatpush1.msra.mxu0 0.0
        %1753 = vmatprep.subr.mxu0 0.0
        %1754 = vmatpush1.msra.mxu0 0.0
        %1755 = vmatprep.subr.mxu0 0.0
        %1756 = vmatpush1.msra.mxu0 0.0
        %1757 = vmatprep.subr.mxu0 0.0
        %1758 = vmatpush1.msra.mxu0 0.0
        %1759 = vmatprep.subr.mxu0 0.0
        %1760 = vmatpush1.msra.mxu0 0.0
        %1761 = vmatprep.subr.mxu0 0.0
        %1762 = vmatpush1.msra.mxu0 0.0
        %1763 = vmatprep.subr.mxu0 0.0
        %1764 = vmatpush1.msra.mxu0 0.0
        %1765 = vmatprep.subr.mxu0 0.0
        %1766 = vmatpush1.msra.mxu0 0.0
        %1767 = vmatprep.subr.mxu0 0.0
        %1768 = vmatpush1.msra.mxu0 0.0
        %1769 = vmatprep.subr.mxu0 0.0
        %1770 = vmatpush1.msra.mxu0 0.0
        %1771 = vmatprep.subr.mxu0 0.0
        %1772 = vmatpush1.msra.mxu0 0.0
        %1773 = vmatprep.subr.mxu0 0.0
        %1774 = vmatpush1.msra.mxu0 0.0
        %1775 = vmatprep.subr.mxu0 0.0
        %1776 = vmatpush1.msra.mxu0 0.0
        %1777 = vmatprep.subr.mxu0 0.0
        %1778 = vmatpush1.msra.mxu0 0.0
        %1779 = vmatprep.subr.mxu0 0.0
        %1780 = vmatpush1.msra.mxu0 0.0
        %1781 = vmatprep.subr.mxu0 0.0
        %1782 = vmatpush1.msra.mxu0 0.0
        %1783 = vmatprep.subr.mxu0 0.0
        %1784 = vmatpush1.msra.mxu0 0.0
        %1785 = vmatprep.subr.mxu0 0.0
        %1786 = vmatpush1.msra.mxu0 0.0
        %1787 = vmatprep.subr.mxu0 0.0
        %1788 = vmatpush1.msra.mxu0 0.0
        %1789 = vmatprep.subr.mxu0 0.0
        %1790 = vmatpush1.msra.mxu0 0.0
        %1791 = vmatprep.subr.mxu0 0.0
        %1792 = vmatpush1.msra.mxu0 0.0
        %1793 = vmatprep.subr.mxu0 0.0
        %1794 = vmatpush1.msra.mxu0 0.0
        %1795 = vmatprep.subr.mxu0 0.0
        %1796 = vmatpush1.msra.mxu0 0.0
        %1797 = vmatprep.subr.mxu0 0.0
        %1798 = vmatpush1.msra.mxu0 0.0
        %1799 = vmatprep.subr.mxu0 0.0
        %1800 = vmatpush1.msra.mxu0 0.0
        %1801 = vmatprep.subr.mxu0 0.0
        %1802 = vmatpush1.msra.mxu0 0.0
        %1803 = vmatprep.subr.mxu0 0.0
        %1804 = vmatpush1.msra.mxu0 0.0
        %1805 = vmatprep.mubr.f32.mxu0 0.0
        %1806 = vmatmul.mubr.f32.gmra.mrb[0].mxu0 %v1739
        %v1807 = vpop.f32.mrb[0].mxu0
        %v1808 = vadd.f32 0.0, %v1807
        %v1809 = vpop.f32.mrb[0].mxu0
        %1810 = vdwg.mxu0
        %v1811 = vcombine.low %v1589, %v1735
        %v1812 = vcombine.high %v1589, %v1735
        %v1814 = vunpack.c.l.s4 1983009808
        %v1815 = vunpack.c.0.s8 %v1814
        %v1816 = vlaneseq
        %v1817 = vshrl.u32 %v1816, 7
        %v1818 = vsub.s32 %v1815, %v1817
        %v1819 = vrot.slane %v1811, %v1818
        %v1821 = vunpack.c.l.s4 1983009808
        %v1822 = vunpack.c.0.s8 %v1821
        %v1823 = vlaneseq
        %v1824 = vshrl.u32 %v1823, 7
        %v1825 = vsub.s32 %v1822, %v1824
        %v1826 = vrot.slane %v1812, %v1825
        %v1827 = vcombine.low %v1662, %v1808
        %v1828 = vcombine.high %v1662, %v1808
        %v1830 = vunpack.c.l.s4 1983009808
        %v1831 = vunpack.c.0.s8 %v1830
        %v1832 = vlaneseq
        %v1833 = vshrl.u32 %v1832, 7
        %v1834 = vsub.s32 %v1831, %v1833
        %v1835 = vrot.slane %v1827, %v1834
        %v1837 = vunpack.c.l.s4 1983009808
        %v1838 = vunpack.c.0.s8 %v1837
        %v1839 = vlaneseq
        %v1840 = vshrl.u32 %v1839, 7
        %v1841 = vsub.s32 %v1838, %v1840
        %v1842 = vrot.slane %v1828, %v1841
        %v1843 = vcombine.low %v1819, %v1835
        %v1844 = vcombine.high %v1819, %v1835
        %v1846 = vunpack.c.l.s4 1934713408
        %v1847 = vunpack.c.0.s8 %v1846
        %v1848 = vlaneseq
        %v1849 = vshrl.u32 %v1848, 7
        %v1850 = vsub.s32 %v1847, %v1849
        %v1851 = vrot.slane %v1843, %v1850
        %v1853 = vunpack.c.l.s4 1934713408
        %v1854 = vunpack.c.0.s8 %v1853
        %v1855 = vlaneseq
        %v1856 = vshrl.u32 %v1855, 7
        %v1857 = vsub.s32 %v1854, %v1856
        %v1858 = vrot.slane %v1844, %v1857
        %v1859 = vcombine.low %v1826, %v1842
        %v1860 = vcombine.high %v1826, %v1842
        %v1862 = vunpack.c.l.s4 1934713408
        %v1863 = vunpack.c.0.s8 %v1862
        %v1864 = vlaneseq
        %v1865 = vshrl.u32 %v1864, 7
        %v1866 = vsub.s32 %v1863, %v1865
        %v1867 = vrot.slane %v1859, %v1866
        %v1869 = vunpack.c.l.s4 1934713408
        %v1870 = vunpack.c.0.s8 %v1869
        %v1871 = vlaneseq
        %v1872 = vshrl.u32 %v1871, 7
        %v1873 = vsub.s32 %v1870, %v1872
        %v1874 = vrot.slane %v1860, %v1873
        %v1875 = vcombine.high %v1851, 0.0
        %v1876 = vcombine.high %v1858, 0.0
        %v1877 = vcombine.high %v1867, 0.0
        %v1878 = vcombine.high %v1874, 0.0
        %v1879 = vcombine.low %v1851, %v1858
        %v1881 = vunpack.c.l.s4 1983009808
        %v1882 = vunpack.c.0.s8 %v1881
        %v1883 = vlaneseq
        %v1884 = vshrl.u32 %v1883, 7
        %v1885 = vsub.s32 %v1882, %v1884
        %v1886 = vrot.slane %v1879, %v1885
        %v1887 = vcombine.low %v1875, %v1876
        %v1889 = vunpack.c.l.s4 1983009808
        %v1890 = vunpack.c.0.s8 %v1889
        %v1891 = vlaneseq
        %v1892 = vshrl.u32 %v1891, 7
        %v1893 = vsub.s32 %v1890, %v1892
        %v1894 = vrot.slane %v1887, %v1893
        %v1895 = vcombine.low %v1867, %v1874
        %v1897 = vunpack.c.l.s4 1983009808
        %v1898 = vunpack.c.0.s8 %v1897
        %v1899 = vlaneseq
        %v1900 = vshrl.u32 %v1899, 7
        %v1901 = vsub.s32 %v1898, %v1900
        %v1902 = vrot.slane %v1895, %v1901
        %v1903 = vcombine.low %v1877, %v1878
        %v1905 = vunpack.c.l.s4 1983009808
        %v1906 = vunpack.c.0.s8 %v1905
        %v1907 = vlaneseq
        %v1908 = vshrl.u32 %v1907, 7
        %v1909 = vsub.s32 %v1906, %v1908
        %v1910 = vrot.slane %v1903, %v1909
        %v1911 = vcombine.low %v1886, %v1894
        %v1912 = vcombine.high %v1886, %v1894
        %v1914 = vunpack.c.l.s4 1934713408
        %v1915 = vunpack.c.0.s8 %v1914
        %v1916 = vlaneseq
        %v1917 = vshrl.u32 %v1916, 7
        %v1918 = vsub.s32 %v1915, %v1917
        %v1919 = vrot.slane %v1911, %v1918
        %v1921 = vunpack.c.l.s4 1934713408
        %v1922 = vunpack.c.0.s8 %v1921
        %v1923 = vlaneseq
        %v1924 = vshrl.u32 %v1923, 7
        %v1925 = vsub.s32 %v1922, %v1924
        %v1926 = vrot.slane %v1912, %v1925
        %v1927 = vcombine.low %v1902, %v1910
        %v1928 = vcombine.high %v1902, %v1910
        %v1930 = vunpack.c.l.s4 1934713408
        %v1931 = vunpack.c.0.s8 %v1930
        %v1932 = vlaneseq
        %v1933 = vshrl.u32 %v1932, 7
        %v1934 = vsub.s32 %v1931, %v1933
        %v1935 = vrot.slane %v1927, %v1934
        %v1937 = vunpack.c.l.s4 1934713408
        %v1938 = vunpack.c.0.s8 %v1937
        %v1939 = vlaneseq
        %v1940 = vshrl.u32 %v1939, 7
        %v1941 = vsub.s32 %v1938, %v1940
        %v1942 = vrot.slane %v1928, %v1941
        %v1943 = vcombine.low %v1919, %v1935
        %v1944 = vcombine.high %v1919, %v1935
        %v1945 = vcombine.low %v1926, %v1942
        %v1946 = vcombine.high %v1926, %v1942
        %1948 = vrot.lane.b32.xlu0 %v1944, 8
        %v1949 = vpop.permute.xlu0 %1948
        %1952 = vrot.lane.b32.xlu0 %v1945, 16
        %v1953 = vpop.permute.xlu0 %1952
        %1956 = vrot.lane.b32.xlu0 %v1946, 24
        %v1957 = vpop.permute.xlu0 %1956
        %v1959 = vsel %vm1170, %v1943, %v1949
        %vm1960 = vcmask 130048
        %v1961 = vsel %vm1960, %v1959, %v1953
        %vm1962 = vcmask 195584
        %v1963 = vsel %vm1962, %v1961, %v1957
        %v1964 = vld [vmem:[%s6] sm:$0xff]
        %v1965 = vld [vmem:[%s6 + $0x8] sm:$0xff]
        %v1966 = vld [vmem:[%s6 + $0x10] sm:$0xff]
        %v1967 = vld [vmem:[%s6 + $0x18] sm:$0xff]
        %v1968 = vld [vmem:[%s7] sm:$0x1]
        %v1970 = vlaneseq
        %v1971 = vshrl.u32 %v1970, 7
        %v1972 = vsub.s32 0, %v1971
        %v1973 = vrot.slane %v1968, %v1972
        %v1976 = vsel %vm571, %v1963, 0
        %1978 = vmatprep.subr.mxu0 0.0
        %1979 = vmatpush1.msra.mxu0 %v1964
        %1980 = vmatprep.subr.mxu0 0.0
        %1981 = vmatpush1.msra.mxu0 %v1965
        %1982 = vmatprep.subr.mxu0 0.0
        %1983 = vmatpush1.msra.mxu0 %v1966
        %1984 = vmatprep.subr.mxu0 0.0
        %1985 = vmatpush1.msra.mxu0 %v1967
        %1986 = vmatprep.subr.mxu0 0.0
        %1987 = vmatpush1.msra.mxu0 0.0
        %1988 = vmatprep.subr.mxu0 0.0
        %1989 = vmatpush1.msra.mxu0 0.0
        %1990 = vmatprep.subr.mxu0 0.0
        %1991 = vmatpush1.msra.mxu0 0.0
        %1992 = vmatprep.subr.mxu0 0.0
        %1993 = vmatpush1.msra.mxu0 0.0
        %1994 = vmatprep.subr.mxu0 0.0
        %1995 = vmatpush1.msra.mxu0 0.0
        %1996 = vmatprep.subr.mxu0 0.0
        %1997 = vmatpush1.msra.mxu0 0.0
        %1998 = vmatprep.subr.mxu0 0.0
        %1999 = vmatpush1.msra.mxu0 0.0
        %2000 = vmatprep.subr.mxu0 0.0
        %2001 = vmatpush1.msra.mxu0 0.0
        %2002 = vmatprep.subr.mxu0 0.0
        %2003 = vmatpush1.msra.mxu0 0.0
        %2004 = vmatprep.subr.mxu0 0.0
        %2005 = vmatpush1.msra.mxu0 0.0
        %2006 = vmatprep.subr.mxu0 0.0
        %2007 = vmatpush1.msra.mxu0 0.0
        %2008 = vmatprep.subr.mxu0 0.0
        %2009 = vmatpush1.msra.mxu0 0.0
        %2010 = vmatprep.subr.mxu0 0.0
        %2011 = vmatpush1.msra.mxu0 0.0
        %2012 = vmatprep.subr.mxu0 0.0
        %2013 = vmatpush1.msra.mxu0 0.0
        %2014 = vmatprep.subr.mxu0 0.0
        %2015 = vmatpush1.msra.mxu0 0.0
        %2016 = vmatprep.subr.mxu0 0.0
        %2017 = vmatpush1.msra.mxu0 0.0
        %2018 = vmatprep.subr.mxu0 0.0
        %2019 = vmatpush1.msra.mxu0 0.0
        %2020 = vmatprep.subr.mxu0 0.0
        %2021 = vmatpush1.msra.mxu0 0.0
        %2022 = vmatprep.subr.mxu0 0.0
        %2023 = vmatpush1.msra.mxu0 0.0
        %2024 = vmatprep.subr.mxu0 0.0
        %2025 = vmatpush1.msra.mxu0 0.0
        %2026 = vmatprep.subr.mxu0 0.0
        %2027 = vmatpush1.msra.mxu0 0.0
        %2028 = vmatprep.subr.mxu0 0.0
        %2029 = vmatpush1.msra.mxu0 0.0
        %2030 = vmatprep.subr.mxu0 0.0
        %2031 = vmatpush1.msra.mxu0 0.0
        %2032 = vmatprep.subr.mxu0 0.0
        %2033 = vmatpush1.msra.mxu0 0.0
        %2034 = vmatprep.subr.mxu0 0.0
        %2035 = vmatpush1.msra.mxu0 0.0
        %2036 = vmatprep.subr.mxu0 0.0
        %2037 = vmatpush1.msra.mxu0 0.0
        %2038 = vmatprep.subr.mxu0 0.0
        %2039 = vmatpush1.msra.mxu0 0.0
        %2040 = vmatprep.subr.mxu0 0.0
        %2041 = vmatpush1.msra.mxu0 0.0
        %2042 = vmatprep.mubr.f32.mxu0 0.0
        %2043 = vmatmul.mubr.f32.gmra.mrb[0].mxu0 %v1976
        %v2044 = vpop.f32.mrb[0].mxu0
        %v2045 = vadd.f32 %v1973, %v2044
        %v2046 = vpop.f32.mrb[0].mxu0
        %2047 = vdwg.mxu0
        %v2048 = vadd.f32 %v559, %v2045
        %v2049 = vld [vmem:[%s8] sm:$0x1]
        %v2050 = vld [vmem:[%s9] sm:$0x1]
        %v2051 = vsel %vm571, %v2048, 0.0
        %2052 = vadd.xlane.f32.xlu0 %v2051
        %v2053 = vpop.xlane.xlu0 %2052
        %v2054 = vrcp.pop 32.0
        %v2055 = vmul.f32 %v2053, %v2054
        %v2056 = vsub.f32 %v2048, %v2055
        %v2057 = vmul.f32 %v2056, %v2056
        %v2058 = vsel %vm571, %v2057, 0.0
        %2059 = vadd.xlane.f32.xlu0 %v2058
        %v2060 = vpop.xlane.xlu0 %2059
        %v2061 = vmul.f32 %v2060, %v2054
        %v2062 = vadd.f32 %v2061, 1e-05
        %v2063 = vrsqrt.pop %v2062
        %v2064 = vmul.f32 %v2056, %v2063
        %v2066 = vlaneseq
        %v2067 = vshrl.u32 %v2066, 7
        %v2068 = vsub.s32 0, %v2067
        %v2069 = vrot.slane %v2049, %v2068
        %v2071 = vmul.f32 %v2064, %v2069
        %v2073 = vlaneseq
        %v2074 = vshrl.u32 %v2073, 7
        %v2075 = vsub.s32 0, %v2074
        %v2076 = vrot.slane %v2050, %v2075
        %v2078 = vadd.f32 %v2071, %v2076
        %v2079 = vld [vmem:[%s10] sm:$0xff]
        %v2080 = vld [vmem:[%s10 + $0x8] sm:$0xff]
        %v2081 = vld [vmem:[%s10 + $0x10] sm:$0xff]
        %v2082 = vld [vmem:[%s10 + $0x18] sm:$0xff]
        %v2083 = vld [vmem:[%s11] sm:$0x1]
        %v2085 = vlaneseq
        %v2086 = vshrl.u32 %v2085, 7
        %v2087 = vsub.s32 0, %v2086
        %v2088 = vrot.slane %v2083, %v2087
        %v2091 = vsel %vm571, %v2078, 0
        %2093 = vmatprep.subr.mxu0 0.0
        %2094 = vmatpush1.msra.mxu0 %v2079
        %2095 = vmatprep.subr.mxu0 0.0
        %2096 = vmatpush1.msra.mxu0 %v2080
        %2097 = vmatprep.subr.mxu0 0.0
        %2098 = vmatpush1.msra.mxu0 %v2081
        %2099 = vmatprep.subr.mxu0 0.0
        %2100 = vmatpush1.msra.mxu0 %v2082
        %2101 = vmatprep.subr.mxu0 0.0
        %2102 = vmatpush1.msra.mxu0 0.0
        %2103 = vmatprep.subr.mxu0 0.0
        %2104 = vmatpush1.msra.mxu0 0.0
        %2105 = vmatprep.subr.mxu0 0.0
        %2106 = vmatpush1.msra.mxu0 0.0
        %2107 = vmatprep.subr.mxu0 0.0
        %2108 = vmatpush1.msra.mxu0 0.0
        %2109 = vmatprep.subr.mxu0 0.0
        %2110 = vmatpush1.msra.mxu0 0.0
        %2111 = vmatprep.subr.mxu0 0.0
        %2112 = vmatpush1.msra.mxu0 0.0
        %2113 = vmatprep.subr.mxu0 0.0
        %2114 = vmatpush1.msra.mxu0 0.0
        %2115 = vmatprep.subr.mxu0 0.0
        %2116 = vmatpush1.msra.mxu0 0.0
        %2117 = vmatprep.subr.mxu0 0.0
        %2118 = vmatpush1.msra.mxu0 0.0
        %2119 = vmatprep.subr.mxu0 0.0
        %2120 = vmatpush1.msra.mxu0 0.0
        %2121 = vmatprep.subr.mxu0 0.0
        %2122 = vmatpush1.msra.mxu0 0.0
        %2123 = vmatprep.subr.mxu0 0.0
        %2124 = vmatpush1.msra.mxu0 0.0
        %2125 = vmatprep.subr.mxu0 0.0
        %2126 = vmatpush1.msra.mxu0 0.0
        %2127 = vmatprep.subr.mxu0 0.0
        %2128 = vmatpush1.msra.mxu0 0.0
        %2129 = vmatprep.subr.mxu0 0.0
        %2130 = vmatpush1.msra.mxu0 0.0
        %2131 = vmatprep.subr.mxu0 0.0
        %2132 = vmatpush1.msra.mxu0 0.0
        %2133 = vmatprep.subr.mxu0 0.0
        %2134 = vmatpush1.msra.mxu0 0.0
        %2135 = vmatprep.subr.mxu0 0.0
        %2136 = vmatpush1.msra.mxu0 0.0
        %2137 = vmatprep.subr.mxu0 0.0
        %2138 = vmatpush1.msra.mxu0 0.0
        %2139 = vmatprep.subr.mxu0 0.0
        %2140 = vmatpush1.msra.mxu0 0.0
        %2141 = vmatprep.subr.mxu0 0.0
        %2142 = vmatpush1.msra.mxu0 0.0
        %2143 = vmatprep.subr.mxu0 0.0
        %2144 = vmatpush1.msra.mxu0 0.0
        %2145 = vmatprep.subr.mxu0 0.0
        %2146 = vmatpush1.msra.mxu0 0.0
        %2147 = vmatprep.subr.mxu0 0.0
        %2148 = vmatpush1.msra.mxu0 0.0
        %2149 = vmatprep.subr.mxu0 0.0
        %2150 = vmatpush1.msra.mxu0 0.0
        %2151 = vmatprep.subr.mxu0 0.0
        %2152 = vmatpush1.msra.mxu0 0.0
        %2153 = vmatprep.subr.mxu0 0.0
        %2154 = vmatpush1.msra.mxu0 0.0
        %2155 = vmatprep.subr.mxu0 0.0
        %2156 = vmatpush1.msra.mxu0 0.0
        %2157 = vmatprep.mubr.f32.mxu0 0.0
        %2158 = vmatmul.mubr.f32.gmra.mrb[0].mxu0 %v2091
        %v2159 = vpop.f32.mrb[0].mxu0
        %v2160 = vadd.f32 %v2088, %v2159
        %v2161 = vpop.f32.mrb[0].mxu0
        %2162 = vdwg.mxu0
        %v2163 = vmax.f32 %v2160, 0.0
        %v2164 = vld [vmem:[%s12] sm:$0xff]
        %v2165 = vld [vmem:[%s12 + $0x8] sm:$0xff]
        %v2166 = vld [vmem:[%s12 + $0x10] sm:$0xff]
        %v2167 = vld [vmem:[%s12 + $0x18] sm:$0xff]
        %v2168 = vld [vmem:[%s12 + $0x20] sm:$0xff]
        %v2169 = vld [vmem:[%s12 + $0x28] sm:$0xff]
        %v2170 = vld [vmem:[%s12 + $0x30] sm:$0xff]
        %v2171 = vld [vmem:[%s12 + $0x38] sm:$0xff]
        %v2172 = vld [vmem:[%s12 + $0x40] sm:$0xff]
        %v2173 = vld [vmem:[%s12 + $0x48] sm:$0xff]
        %v2174 = vld [vmem:[%s12 + $0x50] sm:$0xff]
        %v2175 = vld [vmem:[%s12 + $0x58] sm:$0xff]
        %v2176 = vld [vmem:[%s12 + $0x60] sm:$0xff]
        %v2177 = vld [vmem:[%s12 + $0x68] sm:$0xff]
        %v2178 = vld [vmem:[%s12 + $0x70] sm:$0xff]
        %v2179 = vld [vmem:[%s12 + $0x78] sm:$0xff]
        %v2180 = vld [vmem:[%s13] sm:$0x1]
        %v2182 = vlaneseq
        %v2183 = vshrl.u32 %v2182, 7
        %v2184 = vsub.s32 0, %v2183
        %v2185 = vrot.slane %v2180, %v2184
        %2187 = vmatprep.subr.mxu0 0.0
        %2188 = vmatpush1.msra.mxu0 %v2164
        %2189 = vmatprep.subr.mxu0 0.0
        %2190 = vmatpush1.msra.mxu0 %v2165
        %2191 = vmatprep.subr.mxu0 0.0
        %2192 = vmatpush1.msra.mxu0 %v2166
        %2193 = vmatprep.subr.mxu0 0.0
        %2194 = vmatpush1.msra.mxu0 %v2167
        %2195 = vmatprep.subr.mxu0 0.0
        %2196 = vmatpush1.msra.mxu0 %v2168
        %2197 = vmatprep.subr.mxu0 0.0
        %2198 = vmatpush1.msra.mxu0 %v2169
        %2199 = vmatprep.subr.mxu0 0.0
        %2200 = vmatpush1.msra.mxu0 %v2170
        %2201 = vmatprep.subr.mxu0 0.0
        %2202 = vmatpush1.msra.mxu0 %v2171
        %2203 = vmatprep.subr.mxu0 0.0
        %2204 = vmatpush1.msra.mxu0 %v2172
        %2205 = vmatprep.subr.mxu0 0.0
        %2206 = vmatpush1.msra.mxu0 %v2173
        %2207 = vmatprep.subr.mxu0 0.0
        %2208 = vmatpush1.msra.mxu0 %v2174
        %2209 = vmatprep.subr.mxu0 0.0
        %2210 = vmatpush1.msra.mxu0 %v2175
        %2211 = vmatprep.subr.mxu0 0.0
        %2212 = vmatpush1.msra.mxu0 %v2176
        %2213 = vmatprep.subr.mxu0 0.0
        %2214 = vmatpush1.msra.mxu0 %v2177
        %2215 = vmatprep.subr.mxu0 0.0
        %2216 = vmatpush1.msra.mxu0 %v2178
        %2217 = vmatprep.subr.mxu0 0.0
        %2218 = vmatpush1.msra.mxu0 %v2179
        %2219 = vmatprep.subr.mxu0 0.0
        %2220 = vmatpush1.msra.mxu0 0.0
        %2221 = vmatprep.subr.mxu0 0.0
        %2222 = vmatpush1.msra.mxu0 0.0
        %2223 = vmatprep.subr.mxu0 0.0
        %2224 = vmatpush1.msra.mxu0 0.0
        %2225 = vmatprep.subr.mxu0 0.0
        %2226 = vmatpush1.msra.mxu0 0.0
        %2227 = vmatprep.subr.mxu0 0.0
        %2228 = vmatpush1.msra.mxu0 0.0
        %2229 = vmatprep.subr.mxu0 0.0
        %2230 = vmatpush1.msra.mxu0 0.0
        %2231 = vmatprep.subr.mxu0 0.0
        %2232 = vmatpush1.msra.mxu0 0.0
        %2233 = vmatprep.subr.mxu0 0.0
        %2234 = vmatpush1.msra.mxu0 0.0
        %2235 = vmatprep.subr.mxu0 0.0
        %2236 = vmatpush1.msra.mxu0 0.0
        %2237 = vmatprep.subr.mxu0 0.0
        %2238 = vmatpush1.msra.mxu0 0.0
        %2239 = vmatprep.subr.mxu0 0.0
        %2240 = vmatpush1.msra.mxu0 0.0
        %2241 = vmatprep.subr.mxu0 0.0
        %2242 = vmatpush1.msra.mxu0 0.0
        %2243 = vmatprep.subr.mxu0 0.0
        %2244 = vmatpush1.msra.mxu0 0.0
        %2245 = vmatprep.subr.mxu0 0.0
        %2246 = vmatpush1.msra.mxu0 0.0
        %2247 = vmatprep.subr.mxu0 0.0
        %2248 = vmatpush1.msra.mxu0 0.0
        %2249 = vmatprep.subr.mxu0 0.0
        %2250 = vmatpush1.msra.mxu0 0.0
        %2251 = vmatprep.mubr.f32.mxu0 0.0
        %2252 = vmatmul.mubr.f32.gmra.mrb[0].mxu0 %v2163
        %v2253 = vpop.f32.mrb[0].mxu0
        %v2254 = vadd.f32 %v2185, %v2253
        %v2255 = vpop.f32.mrb[0].mxu0
        %2256 = vdwg.mxu0
        %v2257 = vadd.f32 %v2078, %v2254
        %v2258 = vld [vmem:[%s14] sm:$0x1]
        %v2259 = vld [vmem:[%s15] sm:$0x1]
        %v2260 = vsel %vm571, %v2257, 0.0
        %2261 = vadd.xlane.f32.xlu0 %v2260
        %v2262 = vpop.xlane.xlu0 %2261
        %v2263 = vmul.f32 %v2262, %v2054
        %v2264 = vsub.f32 %v2257, %v2263
        %v2265 = vmul.f32 %v2264, %v2264
        %v2266 = vsel %vm571, %v2265, 0.0
        %2267 = vadd.xlane.f32.xlu0 %v2266
        %v2268 = vpop.xlane.xlu0 %2267
        %v2269 = vmul.f32 %v2268, %v2054
        %v2270 = vadd.f32 %v2269, 1e-05
        %v2271 = vrsqrt.pop %v2270
        %v2272 = vmul.f32 %v2264, %v2271
        %v2274 = vlaneseq
        %v2275 = vshrl.u32 %v2274, 7
        %v2276 = vsub.s32 0, %v2275
        %v2277 = vrot.slane %v2258, %v2276
        %v2279 = vmul.f32 %v2272, %v2277
        %v2281 = vlaneseq
        %v2282 = vshrl.u32 %v2281, 7
        %v2283 = vsub.s32 0, %v2282
        %v2284 = vrot.slane %v2259, %v2283
        %v2286 = vadd.f32 %v2279, %v2284
        %2287 = vst.msk [vmem:[%s547] sm:$0xff] %vm571, %v2286
        %s2288 = sand.u32 %s400, 1
        %s2289 = scalar_lea.sflag [#allocation3], %s2288
        %s2290 = sand.u32 %s400, 1
        %s2291 = smul.addr %s2290, 8
        %s2292 = scalar_lea.vmem [#allocation2], %s2291
        // Predicated region
        $region85: #{tpu_custom_call.1} parent=83 // pred_check
          %p2293 = pneg %p410
        $region86: #{tpu_custom_call.1} parent=83 // pred_check_branch
          %2295 = sbr.rel (%p2293) target = $region88
        $region87: #{tpu_custom_call.1} parent=83 // pred_region
          %s2297 = ssub.s32 128, 128
          %2298 = vsyncadd %s2289, %s2297
          %s2299 = sadd.s32 %s35, %s34
          %s2300 = smul.addr %s2299, 128
          %s2301 = scalar_lea.hbm %s16, %s2300
          %s2303 = sshll.u32 %s2292, 4
          %s2304 = int_to_ptr.vmem [resolvable:$true] %s2303
          %2306 = dma.vmem_to_hbm [thread:$0]  %s2304, 128, %s2301, %s2289
        $region88: #{tpu_custom_call.1} parent=83 // pred_fallthru
          _
      $region84: #{tpu_custom_call.1} parent=5 // pred_fallthru
        _
      %p2307 = scmp.le.s32.totalorder 2, %s25
      // Predicated region
      $region89: #{tpu_custom_call.1} parent=5 // pred_check
        %p2308 = pneg %p2307
      $region90: #{tpu_custom_call.1} parent=5 // pred_check_branch
        %2310 = sbr.rel (%p2308) target = $region92
      $region91: #{tpu_custom_call.1} parent=5 // pred_region
        %s2311 = ssub.s32 %s25, 2
        // Predicated region
        $region93: #{tpu_custom_call.1} parent=91 // pred_check
          %p2312 = pneg %p416
        $region94: #{tpu_custom_call.1} parent=91 // pred_check_branch
          %2314 = sbr.rel (%p2312) target = $region96
        $region95: #{tpu_custom_call.1} parent=91 // pred_region
          %s2315 = sand.u32 %s401, 1
          %s2316 = scalar_lea.sflag [#allocation3], %s2315
          %s2317 = sand.u32 %s401, 1
          %s2318 = smul.addr %s2317, 8
          %s2319 = scalar_lea.vmem [#allocation2], %s2318
          %2320 = dma.done %s2316, 128
        $region96: #{tpu_custom_call.1} parent=91 // pred_fallthru
          _
      $region92: #{tpu_custom_call.1} parent=5 // pred_fallthru
        _
    $region6: #{tpu_custom_call.1} parent=1 // loop_footer
      %s29 = sadd.s32 1, %s25
    $region7: #{tpu_custom_call.1} parent=1 // loop_footer_branch
      %24 = sbr.rel target = $region3
    $region8: #{tpu_custom_call.1} parent=1 // loop_exit
      _
    %2321 = vsyncpa [#allocation3], 1
    %s2322 = scalar_lea.sflag [#allocation3], 1
    %2323 = vsyncpa %s2322, 1

</llo_original>
